<compile_context>
chip_gen: v7x
topology: tpu7x:2x2x1
jax: 0.10.0
libtpu: 0.0.40
codegen_flags: <defaults>
</compile_context>

<pallas_src>
import jax
import jax.numpy as jnp
from jax import lax
from jax.experimental import pallas as pl
from jax.experimental.pallas import tpu as pltpu


def lstm_dense_softmax_kernel(idx_ref, fused_ref, whh_ref, b_ref, wd_ref, bd_ref, out_ref):
    # idx_ref:   [T*B, 1] int32  token indices, time-major flattened (row = t*B + b)
    # fused_ref: [V, 4H]  bf16   precomputed embedding @ W_ih table, gate order (i,f,o,g)
    # whh_ref:   [H, 4H]  bf16   LSTM hidden->gates weight (transposed, gate order i,f,o,g)
    # b_ref:     [1, 4H]  f32    combined bias (bias_ih + bias_hh), gate order (i,f,o,g)
    # wd_ref:    [H, F]   bf16   dense weight (transposed)
    # bd_ref:    [1, F]   f32    dense bias
    # out_ref:   [B, F]   f32    softmax probabilities
    TB = idx_ref.shape[0]
    V = fused_ref.shape[0]
    H = whh_ref.shape[0]
    B = out_ref.shape[0]
    T = TB // B
    wdt = fused_ref.dtype  # bf16

    # ---- Embedding + input projection via one fused table (hoisted out of recurrence) --
    ids = idx_ref[...]                                          # [T*B, 1] int32
    cols = lax.broadcasted_iota(jnp.int32, (TB, V), 1)          # [T*B, V]
    onehot = jnp.where(cols == ids, 1.0, 0.0).astype(wdt)       # exact 0/1 in bf16
    xw = jnp.dot(onehot, fused_ref[...],
                 preferred_element_type=jnp.float32) + b_ref[...]   # [T*B, 4H] f32

    # ---- Recurrence: only h @ W_hh + gate math on the serial path ----------------------
    whh = whh_ref[...]                                          # hoisted weight load
    h = jnp.zeros((B, H), jnp.float32)
    c = jnp.zeros((B, H), jnp.float32)
    for t in range(T):                                          # fully unrolled (T static)
        gates = xw[t * B:(t + 1) * B, :] + jnp.dot(
            h.astype(wdt), whh, preferred_element_type=jnp.float32)   # [B, 4H]
        # Gate order (i, f, o, g): one contiguous sigmoid, one trailing tanh.
        sig = jax.nn.sigmoid(gates[:, 0:3 * H])                 # [B, 3H]
        g_g = jnp.tanh(gates[:, 3 * H:4 * H])                   # [B, H]
        i_g = sig[:, 0:H]
        f_g = sig[:, H:2 * H]
        o_g = sig[:, 2 * H:3 * H]
        c = f_g * c + i_g * g_g
        h = o_g * jnp.tanh(c)

    # ---- Dense on last timestep + stable softmax (exact normalization) -----------------
    logits = jnp.dot(h.astype(wdt), wd_ref[...],
                     preferred_element_type=jnp.float32) + bd_ref[...]   # [B, F]
    m = jnp.max(logits, axis=1, keepdims=True)
    e = jnp.exp(logits - m)
    out_ref[...] = e / jnp.sum(e, axis=1, keepdims=True)


def _prepare(params):
    """Fold embedding @ W_ih into one table (f32), reorder gates (i,f,g,o)->(i,f,o,g),
    cast MXU operands to bf16. Used by both the kernel wrapper and the reference."""
    emb_w = params["embedding"]          # [V, F] f32
    w_ih_t = params["w_ih_t"]            # [F, 4H] f32 (gate order i,f,g,o)
    w_hh_t = params["w_hh_t"]            # [H, 4H] f32 (gate order i,f,g,o)
    bias = params["bias"]                # [1, 4H] f32
    w_d_t = params["w_d_t"]              # [H, F] f32
    b_d = params["b_d"]                  # [1, F] f32
    H = w_hh_t.shape[0]

    fused = jnp.dot(emb_w, w_ih_t)       # [V, 4H] f32, constant wrt. activations

    def reorder(mat):                    # (i, f, g, o) -> (i, f, o, g) along last axis
        i = mat[..., 0:H]
        f = mat[..., H:2 * H]
        g = mat[..., 2 * H:3 * H]
        o = mat[..., 3 * H:4 * H]
        return jnp.concatenate([i, f, o, g], axis=-1)

    wdt = jnp.bfloat16
    fused_bf = reorder(fused).astype(wdt)
    whh_bf = reorder(w_hh_t).astype(wdt)
    bias_r = reorder(bias)
    wd_bf = w_d_t.astype(wdt)
    return fused_bf, whh_bf, bias_r, wd_bf, b_d


@jax.jit
def pytorch_model_forward(x_idx, params):
    """x_idx: int32 [B, T] token indices. Returns softmax probabilities [B, F] (f32)."""
    fused_bf, whh_bf, bias_r, wd_bf, b_d = _prepare(params)
    B, T = x_idx.shape
    V, G = fused_bf.shape                # G = 4H
    H = whh_bf.shape[0]
    F = wd_bf.shape[1]

    # Tiny index array, time-major flattened: row r = t*B + b.
    idx2d = jnp.transpose(x_idx, (1, 0)).reshape(T * B, 1).astype(jnp.int32)

    cost = pl.CostEstimate(
        flops=(2 * T * B * V * G          # onehot @ fused table
               + 2 * T * B * H * G        # h @ W_hh over T steps
               + 2 * B * H * F),          # dense
        transcendentals=T * B * 5 * H + B * F,
        bytes_accessed=(T * B * 4
                        + (V * G + H * G + H * F) * 2
                        + (G + F) * 4
                        + B * F * 4),
    )

    vmem = pl.BlockSpec(memory_space=pltpu.MemorySpace.VMEM)
    out = pl.pallas_call(
        lstm_dense_softmax_kernel,
        out_shape=jax.ShapeDtypeStruct((B, F), jnp.float32),
        in_specs=[vmem] * 6,
        out_specs=vmem,
        cost_estimate=cost,
    )(idx2d, fused_bf, whh_bf, bias_r, wd_bf, b_d)
    return out


def reference_forward(x_idx, params):
    """Pure-JAX reference using the exact same fused-table / bf16-weight math."""
    fused_bf, whh_bf, bias_r, wd_bf, b_d = _prepare(params)
    wdt = jnp.bfloat16
    B, T = x_idx.shape
    H = whh_bf.shape[0]

    xw = jnp.take(fused_bf, x_idx, axis=0).astype(jnp.float32) + bias_r   # [B, T, 4H]
    h = jnp.zeros((B, H), jnp.float32)
    c = jnp.zeros((B, H), jnp.float32)
    for t in range(T):
        gates = xw[:, t] + jnp.dot(h.astype(wdt), whh_bf,
                                   preferred_element_type=jnp.float32)    # [B, 4H]
        sig = jax.nn.sigmoid(gates[:, 0:3 * H])
        g_g = jnp.tanh(gates[:, 3 * H:4 * H])
        i_g = sig[:, 0:H]
        f_g = sig[:, H:2 * H]
        o_g = sig[:, 2 * H:3 * H]
        c = f_g * c + i_g * g_g
        h = o_g * jnp.tanh(c)
    logits = jnp.dot(h.astype(wdt), wd_bf, preferred_element_type=jnp.float32) + b_d
    return jax.nn.softmax(logits, axis=1)


def init_params(key, num_features, latent_dim):
    """Deterministic init mirroring PyTorch defaults (N(0,1) embedding, U(-k,k) LSTM/Linear).
    Stored in PyTorch's native gate order (i, f, g, o); reorder happens in _prepare."""
    k_emb, k_ih, k_hh, k_bih, k_bhh, k_wd, k_bd = jax.random.split(key, 7)
    H = latent_dim
    F = num_features
    k_lstm = 1.0 / jnp.sqrt(H)
    k_lin = 1.0 / jnp.sqrt(H)

    emb_w = jax.random.normal(k_emb, (F, F), jnp.float32)
    # PyTorch stores weight_ih as [4H, F]; we keep the transposed form [F, 4H].
    w_ih_t = jax.random.uniform(k_ih, (F, 4 * H), jnp.float32, -k_lstm, k_lstm)
    w_hh_t = jax.random.uniform(k_hh, (H, 4 * H), jnp.float32, -k_lstm, k_lstm)
    b_ih = jax.random.uniform(k_bih, (4 * H,), jnp.float32, -k_lstm, k_lstm)
    b_hh = jax.random.uniform(k_bhh, (4 * H,), jnp.float32, -k_lstm, k_lstm)
    bias = (b_ih + b_hh).reshape(1, 4 * H)
    # Dense: PyTorch weight is [F, H]; keep transposed [H, F].
    w_d_t = jax.random.uniform(k_wd, (H, F), jnp.float32, -k_lin, k_lin)
    b_d = jax.random.uniform(k_bd, (F,), jnp.float32, -k_lin, k_lin).reshape(1, F)

    return dict(embedding=emb_w, w_ih_t=w_ih_t, w_hh_t=w_hh_t, bias=bias,
                w_d_t=w_d_t, b_d=b_d)


if __name__ == "__main__":
    num_features = 128   # vocab size == embedding dim == output dim
    latent_dim = 128     # LSTM hidden size
    sequence_length = 8
    batch = 8

    key = jax.random.PRNGKey(0)
    k_param, k_data = jax.random.split(key)
    params = init_params(k_param, num_features, latent_dim)
    x_idx = jax.random.randint(k_data, (batch, sequence_length), 0, num_features,
                               dtype=jnp.int32)

    out = pytorch_model_forward(x_idx, params)
    out = jax.block_until_ready(out)

    assert out.shape == (batch, num_features)
    # Exact softmax normalization: rows sum to 1.
    assert jnp.allclose(jnp.sum(out, axis=1), 1.0, atol=1e-5)
    # Match a pure-JAX reference using the same fused-table bf16 math.
    ref = reference_forward(x_idx, params)
    assert jnp.allclose(out, ref, atol=2e-3), float(jnp.max(jnp.abs(out - ref)))
    print("KERNEL_OK")
</pallas_src>

<mosaic_0001>
module attributes {stable_mosaic.version = 11 : i64} {
  func.func @lstm_dense_softmax_kernel(%arg0: memref<64x1xi32, #tpu.memory_space<vmem>>, %arg1: memref<128x512xbf16, #tpu.memory_space<vmem>>, %arg2: memref<128x512xbf16, #tpu.memory_space<vmem>>, %arg3: memref<1x512xf32, #tpu.memory_space<vmem>>, %arg4: memref<128x128xbf16, #tpu.memory_space<vmem>>, %arg5: memref<1x128xf32, #tpu.memory_space<vmem>>, %arg6: memref<8x128xf32, #tpu.memory_space<vmem>>) attributes {dimension_semantics = [], scalar_prefetch = 0 : i64, scratch_operands = 0 : i64, tpu.core_type = #tpu.core_type<tc>} {
    %c0 = arith.constant 0 : index
    %c0_0 = arith.constant 0 : index
    %0 = vector.load %arg0[%c0, %c0_0] : memref<64x1xi32, #tpu.memory_space<vmem>>, vector<64x1xi32>
    %1 = tpu.iota {dimensions = array<i32: 1>} : vector<64x128xi32>
    %2 = vector.broadcast %0 : vector<64x1xi32> to vector<64x128xi32>
    %3 = arith.cmpi eq, %1, %2 : vector<64x128xi32>
    %cst = arith.constant 1.000000e+00 : f32
    %cst_1 = arith.constant 0.000000e+00 : f32
    %4 = vector.broadcast %cst : f32 to vector<64x128xf32>
    %5 = vector.broadcast %cst_1 : f32 to vector<64x128xf32>
    %6 = arith.select %3, %4, %5 : vector<64x128xi1>, vector<64x128xf32>
    %7 = arith.truncf %6 : vector<64x128xf32> to vector<64x128xbf16>
    %c0_2 = arith.constant 0 : index
    %c0_3 = arith.constant 0 : index
    %8 = vector.load %arg1[%c0_2, %c0_3] : memref<128x512xbf16, #tpu.memory_space<vmem>>, vector<128x512xbf16>
    %cst_4 = arith.constant dense<0.000000e+00> : vector<64x512xf32>
    %9 = tpu.matmul %7, %8, %cst_4 {dimension_numbers = #tpu.dot_dimension_numbers<[1], [0], [0], [1], [0, 0, 1, 1], [], []>} : vector<64x128xbf16>, vector<128x512xbf16>, vector<64x512xf32> -> vector<64x512xf32>
    %c0_5 = arith.constant 0 : index
    %c0_6 = arith.constant 0 : index
    %10 = vector.load %arg3[%c0_5, %c0_6] : memref<1x512xf32, #tpu.memory_space<vmem>>, vector<1x512xf32>
    %11 = vector.broadcast %10 : vector<1x512xf32> to vector<64x512xf32>
    %12 = arith.addf %9, %11 : vector<64x512xf32>
    %c0_7 = arith.constant 0 : index
    %c0_8 = arith.constant 0 : index
    %13 = vector.load %arg2[%c0_7, %c0_8] : memref<128x512xbf16, #tpu.memory_space<vmem>>, vector<128x512xbf16>
    %cst_9 = arith.constant 0.000000e+00 : f32
    %14 = vector.broadcast %cst_9 : f32 to vector<8x128xf32>
    %cst_10 = arith.constant 0.000000e+00 : f32
    %15 = vector.broadcast %cst_10 : f32 to vector<8x128xf32>
    %16 = vector.extract_strided_slice %12 {offsets = [0, 0], sizes = [8, 512], strides = [1, 1]} : vector<64x512xf32> to vector<8x512xf32>
    %17 = arith.truncf %14 : vector<8x128xf32> to vector<8x128xbf16>
    %cst_11 = arith.constant dense<0.000000e+00> : vector<8x512xf32>
    %18 = tpu.matmul %17, %13, %cst_11 {dimension_numbers = #tpu.dot_dimension_numbers<[1], [0], [0], [1], [0, 0, 1, 1], [], []>} : vector<8x128xbf16>, vector<128x512xbf16>, vector<8x512xf32> -> vector<8x512xf32>
    %19 = arith.addf %16, %18 : vector<8x512xf32>
    %20 = vector.extract_strided_slice %19 {offsets = [0, 0], sizes = [8, 384], strides = [1, 1]} : vector<8x512xf32> to vector<8x384xf32>
    %21 = arith.negf %20 : vector<8x384xf32>
    %22 = math.exp %21 : vector<8x384xf32>
    %cst_12 = arith.constant 1.000000e+00 : f32
    %23 = vector.broadcast %cst_12 : f32 to vector<8x384xf32>
    %24 = arith.addf %23, %22 : vector<8x384xf32>
    %25 = arith.divf %23, %24 : vector<8x384xf32>
    %26 = vector.extract_strided_slice %19 {offsets = [0, 384], sizes = [8, 128], strides = [1, 1]} : vector<8x512xf32> to vector<8x128xf32>
    %27 = math.tanh %26 : vector<8x128xf32>
    %28 = vector.extract_strided_slice %25 {offsets = [0, 0], sizes = [8, 128], strides = [1, 1]} : vector<8x384xf32> to vector<8x128xf32>
    %29 = vector.extract_strided_slice %25 {offsets = [0, 128], sizes = [8, 128], strides = [1, 1]} : vector<8x384xf32> to vector<8x128xf32>
    %30 = vector.extract_strided_slice %25 {offsets = [0, 256], sizes = [8, 128], strides = [1, 1]} : vector<8x384xf32> to vector<8x128xf32>
    %31 = arith.mulf %29, %15 : vector<8x128xf32>
    %32 = arith.mulf %28, %27 : vector<8x128xf32>
    %33 = arith.addf %31, %32 : vector<8x128xf32>
    %34 = math.tanh %33 : vector<8x128xf32>
    %35 = arith.mulf %30, %34 : vector<8x128xf32>
    %36 = vector.extract_strided_slice %12 {offsets = [8, 0], sizes = [8, 512], strides = [1, 1]} : vector<64x512xf32> to vector<8x512xf32>
    %37 = arith.truncf %35 : vector<8x128xf32> to vector<8x128xbf16>
    %cst_13 = arith.constant dense<0.000000e+00> : vector<8x512xf32>
    %38 = tpu.matmul %37, %13, %cst_13 {dimension_numbers = #tpu.dot_dimension_numbers<[1], [0], [0], [1], [0, 0, 1, 1], [], []>} : vector<8x128xbf16>, vector<128x512xbf16>, vector<8x512xf32> -> vector<8x512xf32>
    %39 = arith.addf %36, %38 : vector<8x512xf32>
    %40 = vector.extract_strided_slice %39 {offsets = [0, 0], sizes = [8, 384], strides = [1, 1]} : vector<8x512xf32> to vector<8x384xf32>
    %41 = arith.negf %40 : vector<8x384xf32>
    %42 = math.exp %41 : vector<8x384xf32>
    %cst_14 = arith.constant 1.000000e+00 : f32
    %43 = vector.broadcast %cst_14 : f32 to vector<8x384xf32>
    %44 = arith.addf %43, %42 : vector<8x384xf32>
    %45 = arith.divf %43, %44 : vector<8x384xf32>
    %46 = vector.extract_strided_slice %39 {offsets = [0, 384], sizes = [8, 128], strides = [1, 1]} : vector<8x512xf32> to vector<8x128xf32>
    %47 = math.tanh %46 : vector<8x128xf32>
    %48 = vector.extract_strided_slice %45 {offsets = [0, 0], sizes = [8, 128], strides = [1, 1]} : vector<8x384xf32> to vector<8x128xf32>
    %49 = vector.extract_strided_slice %45 {offsets = [0, 128], sizes = [8, 128], strides = [1, 1]} : vector<8x384xf32> to vector<8x128xf32>
    %50 = vector.extract_strided_slice %45 {offsets = [0, 256], sizes = [8, 128], strides = [1, 1]} : vector<8x384xf32> to vector<8x128xf32>
    %51 = arith.mulf %49, %33 : vector<8x128xf32>
    %52 = arith.mulf %48, %47 : vector<8x128xf32>
    %53 = arith.addf %51, %52 : vector<8x128xf32>
    %54 = math.tanh %53 : vector<8x128xf32>
    %55 = arith.mulf %50, %54 : vector<8x128xf32>
    %56 = vector.extract_strided_slice %12 {offsets = [16, 0], sizes = [8, 512], strides = [1, 1]} : vector<64x512xf32> to vector<8x512xf32>
    %57 = arith.truncf %55 : vector<8x128xf32> to vector<8x128xbf16>
    %cst_15 = arith.constant dense<0.000000e+00> : vector<8x512xf32>
    %58 = tpu.matmul %57, %13, %cst_15 {dimension_numbers = #tpu.dot_dimension_numbers<[1], [0], [0], [1], [0, 0, 1, 1], [], []>} : vector<8x128xbf16>, vector<128x512xbf16>, vector<8x512xf32> -> vector<8x512xf32>
    %59 = arith.addf %56, %58 : vector<8x512xf32>
    %60 = vector.extract_strided_slice %59 {offsets = [0, 0], sizes = [8, 384], strides = [1, 1]} : vector<8x512xf32> to vector<8x384xf32>
    %61 = arith.negf %60 : vector<8x384xf32>
    %62 = math.exp %61 : vector<8x384xf32>
    %cst_16 = arith.constant 1.000000e+00 : f32
    %63 = vector.broadcast %cst_16 : f32 to vector<8x384xf32>
    %64 = arith.addf %63, %62 : vector<8x384xf32>
    %65 = arith.divf %63, %64 : vector<8x384xf32>
    %66 = vector.extract_strided_slice %59 {offsets = [0, 384], sizes = [8, 128], strides = [1, 1]} : vector<8x512xf32> to vector<8x128xf32>
    %67 = math.tanh %66 : vector<8x128xf32>
    %68 = vector.extract_strided_slice %65 {offsets = [0, 0], sizes = [8, 128], strides = [1, 1]} : vector<8x384xf32> to vector<8x128xf32>
    %69 = vector.extract_strided_slice %65 {offsets = [0, 128], sizes = [8, 128], strides = [1, 1]} : vector<8x384xf32> to vector<8x128xf32>
    %70 = vector.extract_strided_slice %65 {offsets = [0, 256], sizes = [8, 128], strides = [1, 1]} : vector<8x384xf32> to vector<8x128xf32>
    %71 = arith.mulf %69, %53 : vector<8x128xf32>
    %72 = arith.mulf %68, %67 : vector<8x128xf32>
    %73 = arith.addf %71, %72 : vector<8x128xf32>
    %74 = math.tanh %73 : vector<8x128xf32>
    %75 = arith.mulf %70, %74 : vector<8x128xf32>
    %76 = vector.extract_strided_slice %12 {offsets = [24, 0], sizes = [8, 512], strides = [1, 1]} : vector<64x512xf32> to vector<8x512xf32>
    %77 = arith.truncf %75 : vector<8x128xf32> to vector<8x128xbf16>
    %cst_17 = arith.constant dense<0.000000e+00> : vector<8x512xf32>
    %78 = tpu.matmul %77, %13, %cst_17 {dimension_numbers = #tpu.dot_dimension_numbers<[1], [0], [0], [1], [0, 0, 1, 1], [], []>} : vector<8x128xbf16>, vector<128x512xbf16>, vector<8x512xf32> -> vector<8x512xf32>
    %79 = arith.addf %76, %78 : vector<8x512xf32>
    %80 = vector.extract_strided_slice %79 {offsets = [0, 0], sizes = [8, 384], strides = [1, 1]} : vector<8x512xf32> to vector<8x384xf32>
    %81 = arith.negf %80 : vector<8x384xf32>
    %82 = math.exp %81 : vector<8x384xf32>
    %cst_18 = arith.constant 1.000000e+00 : f32
    %83 = vector.broadcast %cst_18 : f32 to vector<8x384xf32>
    %84 = arith.addf %83, %82 : vector<8x384xf32>
    %85 = arith.divf %83, %84 : vector<8x384xf32>
    %86 = vector.extract_strided_slice %79 {offsets = [0, 384], sizes = [8, 128], strides = [1, 1]} : vector<8x512xf32> to vector<8x128xf32>
    %87 = math.tanh %86 : vector<8x128xf32>
    %88 = vector.extract_strided_slice %85 {offsets = [0, 0], sizes = [8, 128], strides = [1, 1]} : vector<8x384xf32> to vector<8x128xf32>
    %89 = vector.extract_strided_slice %85 {offsets = [0, 128], sizes = [8, 128], strides = [1, 1]} : vector<8x384xf32> to vector<8x128xf32>
    %90 = vector.extract_strided_slice %85 {offsets = [0, 256], sizes = [8, 128], strides = [1, 1]} : vector<8x384xf32> to vector<8x128xf32>
    %91 = arith.mulf %89, %73 : vector<8x128xf32>
    %92 = arith.mulf %88, %87 : vector<8x128xf32>
    %93 = arith.addf %91, %92 : vector<8x128xf32>
    %94 = math.tanh %93 : vector<8x128xf32>
    %95 = arith.mulf %90, %94 : vector<8x128xf32>
    %96 = vector.extract_strided_slice %12 {offsets = [32, 0], sizes = [8, 512], strides = [1, 1]} : vector<64x512xf32> to vector<8x512xf32>
    %97 = arith.truncf %95 : vector<8x128xf32> to vector<8x128xbf16>
    %cst_19 = arith.constant dense<0.000000e+00> : vector<8x512xf32>
    %98 = tpu.matmul %97, %13, %cst_19 {dimension_numbers = #tpu.dot_dimension_numbers<[1], [0], [0], [1], [0, 0, 1, 1], [], []>} : vector<8x128xbf16>, vector<128x512xbf16>, vector<8x512xf32> -> vector<8x512xf32>
    %99 = arith.addf %96, %98 : vector<8x512xf32>
    %100 = vector.extract_strided_slice %99 {offsets = [0, 0], sizes = [8, 384], strides = [1, 1]} : vector<8x512xf32> to vector<8x384xf32>
    %101 = arith.negf %100 : vector<8x384xf32>
    %102 = math.exp %101 : vector<8x384xf32>
    %cst_20 = arith.constant 1.000000e+00 : f32
    %103 = vector.broadcast %cst_20 : f32 to vector<8x384xf32>
    %104 = arith.addf %103, %102 : vector<8x384xf32>
    %105 = arith.divf %103, %104 : vector<8x384xf32>
    %106 = vector.extract_strided_slice %99 {offsets = [0, 384], sizes = [8, 128], strides = [1, 1]} : vector<8x512xf32> to vector<8x128xf32>
    %107 = math.tanh %106 : vector<8x128xf32>
    %108 = vector.extract_strided_slice %105 {offsets = [0, 0], sizes = [8, 128], strides = [1, 1]} : vector<8x384xf32> to vector<8x128xf32>
    %109 = vector.extract_strided_slice %105 {offsets = [0, 128], sizes = [8, 128], strides = [1, 1]} : vector<8x384xf32> to vector<8x128xf32>
    %110 = vector.extract_strided_slice %105 {offsets = [0, 256], sizes = [8, 128], strides = [1, 1]} : vector<8x384xf32> to vector<8x128xf32>
    %111 = arith.mulf %109, %93 : vector<8x128xf32>
    %112 = arith.mulf %108, %107 : vector<8x128xf32>
    %113 = arith.addf %111, %112 : vector<8x128xf32>
    %114 = math.tanh %113 : vector<8x128xf32>
    %115 = arith.mulf %110, %114 : vector<8x128xf32>
    %116 = vector.extract_strided_slice %12 {offsets = [40, 0], sizes = [8, 512], strides = [1, 1]} : vector<64x512xf32> to vector<8x512xf32>
    %117 = arith.truncf %115 : vector<8x128xf32> to vector<8x128xbf16>
    %cst_21 = arith.constant dense<0.000000e+00> : vector<8x512xf32>
    %118 = tpu.matmul %117, %13, %cst_21 {dimension_numbers = #tpu.dot_dimension_numbers<[1], [0], [0], [1], [0, 0, 1, 1], [], []>} : vector<8x128xbf16>, vector<128x512xbf16>, vector<8x512xf32> -> vector<8x512xf32>
    %119 = arith.addf %116, %118 : vector<8x512xf32>
    %120 = vector.extract_strided_slice %119 {offsets = [0, 0], sizes = [8, 384], strides = [1, 1]} : vector<8x512xf32> to vector<8x384xf32>
    %121 = arith.negf %120 : vector<8x384xf32>
    %122 = math.exp %121 : vector<8x384xf32>
    %cst_22 = arith.constant 1.000000e+00 : f32
    %123 = vector.broadcast %cst_22 : f32 to vector<8x384xf32>
    %124 = arith.addf %123, %122 : vector<8x384xf32>
    %125 = arith.divf %123, %124 : vector<8x384xf32>
    %126 = vector.extract_strided_slice %119 {offsets = [0, 384], sizes = [8, 128], strides = [1, 1]} : vector<8x512xf32> to vector<8x128xf32>
    %127 = math.tanh %126 : vector<8x128xf32>
    %128 = vector.extract_strided_slice %125 {offsets = [0, 0], sizes = [8, 128], strides = [1, 1]} : vector<8x384xf32> to vector<8x128xf32>
    %129 = vector.extract_strided_slice %125 {offsets = [0, 128], sizes = [8, 128], strides = [1, 1]} : vector<8x384xf32> to vector<8x128xf32>
    %130 = vector.extract_strided_slice %125 {offsets = [0, 256], sizes = [8, 128], strides = [1, 1]} : vector<8x384xf32> to vector<8x128xf32>
    %131 = arith.mulf %129, %113 : vector<8x128xf32>
    %132 = arith.mulf %128, %127 : vector<8x128xf32>
    %133 = arith.addf %131, %132 : vector<8x128xf32>
    %134 = math.tanh %133 : vector<8x128xf32>
    %135 = arith.mulf %130, %134 : vector<8x128xf32>
    %136 = vector.extract_strided_slice %12 {offsets = [48, 0], sizes = [8, 512], strides = [1, 1]} : vector<64x512xf32> to vector<8x512xf32>
    %137 = arith.truncf %135 : vector<8x128xf32> to vector<8x128xbf16>
    %cst_23 = arith.constant dense<0.000000e+00> : vector<8x512xf32>
    %138 = tpu.matmul %137, %13, %cst_23 {dimension_numbers = #tpu.dot_dimension_numbers<[1], [0], [0], [1], [0, 0, 1, 1], [], []>} : vector<8x128xbf16>, vector<128x512xbf16>, vector<8x512xf32> -> vector<8x512xf32>
    %139 = arith.addf %136, %138 : vector<8x512xf32>
    %140 = vector.extract_strided_slice %139 {offsets = [0, 0], sizes = [8, 384], strides = [1, 1]} : vector<8x512xf32> to vector<8x384xf32>
    %141 = arith.negf %140 : vector<8x384xf32>
    %142 = math.exp %141 : vector<8x384xf32>
    %cst_24 = arith.constant 1.000000e+00 : f32
    %143 = vector.broadcast %cst_24 : f32 to vector<8x384xf32>
    %144 = arith.addf %143, %142 : vector<8x384xf32>
    %145 = arith.divf %143, %144 : vector<8x384xf32>
    %146 = vector.extract_strided_slice %139 {offsets = [0, 384], sizes = [8, 128], strides = [1, 1]} : vector<8x512xf32> to vector<8x128xf32>
    %147 = math.tanh %146 : vector<8x128xf32>
    %148 = vector.extract_strided_slice %145 {offsets = [0, 0], sizes = [8, 128], strides = [1, 1]} : vector<8x384xf32> to vector<8x128xf32>
    %149 = vector.extract_strided_slice %145 {offsets = [0, 128], sizes = [8, 128], strides = [1, 1]} : vector<8x384xf32> to vector<8x128xf32>
    %150 = vector.extract_strided_slice %145 {offsets = [0, 256], sizes = [8, 128], strides = [1, 1]} : vector<8x384xf32> to vector<8x128xf32>
    %151 = arith.mulf %149, %133 : vector<8x128xf32>
    %152 = arith.mulf %148, %147 : vector<8x128xf32>
    %153 = arith.addf %151, %152 : vector<8x128xf32>
    %154 = math.tanh %153 : vector<8x128xf32>
    %155 = arith.mulf %150, %154 : vector<8x128xf32>
    %156 = vector.extract_strided_slice %12 {offsets = [56, 0], sizes = [8, 512], strides = [1, 1]} : vector<64x512xf32> to vector<8x512xf32>
    %157 = arith.truncf %155 : vector<8x128xf32> to vector<8x128xbf16>
    %cst_25 = arith.constant dense<0.000000e+00> : vector<8x512xf32>
    %158 = tpu.matmul %157, %13, %cst_25 {dimension_numbers = #tpu.dot_dimension_numbers<[1], [0], [0], [1], [0, 0, 1, 1], [], []>} : vector<8x128xbf16>, vector<128x512xbf16>, vector<8x512xf32> -> vector<8x512xf32>
    %159 = arith.addf %156, %158 : vector<8x512xf32>
    %160 = vector.extract_strided_slice %159 {offsets = [0, 0], sizes = [8, 384], strides = [1, 1]} : vector<8x512xf32> to vector<8x384xf32>
    %161 = arith.negf %160 : vector<8x384xf32>
    %162 = math.exp %161 : vector<8x384xf32>
    %cst_26 = arith.constant 1.000000e+00 : f32
    %163 = vector.broadcast %cst_26 : f32 to vector<8x384xf32>
    %164 = arith.addf %163, %162 : vector<8x384xf32>
    %165 = arith.divf %163, %164 : vector<8x384xf32>
    %166 = vector.extract_strided_slice %159 {offsets = [0, 384], sizes = [8, 128], strides = [1, 1]} : vector<8x512xf32> to vector<8x128xf32>
    %167 = math.tanh %166 : vector<8x128xf32>
    %168 = vector.extract_strided_slice %165 {offsets = [0, 0], sizes = [8, 128], strides = [1, 1]} : vector<8x384xf32> to vector<8x128xf32>
    %169 = vector.extract_strided_slice %165 {offsets = [0, 128], sizes = [8, 128], strides = [1, 1]} : vector<8x384xf32> to vector<8x128xf32>
    %170 = vector.extract_strided_slice %165 {offsets = [0, 256], sizes = [8, 128], strides = [1, 1]} : vector<8x384xf32> to vector<8x128xf32>
    %171 = arith.mulf %169, %153 : vector<8x128xf32>
    %172 = arith.mulf %168, %167 : vector<8x128xf32>
    %173 = arith.addf %171, %172 : vector<8x128xf32>
    %174 = math.tanh %173 : vector<8x128xf32>
    %175 = arith.mulf %170, %174 : vector<8x128xf32>
    %176 = arith.truncf %175 : vector<8x128xf32> to vector<8x128xbf16>
    %c0_27 = arith.constant 0 : index
    %c0_28 = arith.constant 0 : index
    %177 = vector.load %arg4[%c0_27, %c0_28] : memref<128x128xbf16, #tpu.memory_space<vmem>>, vector<128x128xbf16>
    %cst_29 = arith.constant dense<0.000000e+00> : vector<8x128xf32>
    %178 = tpu.matmul %176, %177, %cst_29 {dimension_numbers = #tpu.dot_dimension_numbers<[1], [0], [0], [1], [0, 0, 1, 1], [], []>} : vector<8x128xbf16>, vector<128x128xbf16>, vector<8x128xf32> -> vector<8x128xf32>
    %c0_30 = arith.constant 0 : index
    %c0_31 = arith.constant 0 : index
    %179 = vector.load %arg5[%c0_30, %c0_31] : memref<1x128xf32, #tpu.memory_space<vmem>>, vector<1x128xf32>
    %180 = vector.broadcast %179 : vector<1x128xf32> to vector<8x128xf32>
    %181 = arith.addf %178, %180 : vector<8x128xf32>
    %cst_32 = arith.constant dense<0xFF800000> : vector<8xf32>
    %182 = vector.multi_reduction <maximumf>, %181, %cst_32 [1] : vector<8x128xf32> to vector<8xf32>
    %183 = vector.shape_cast %182 : vector<8xf32> to vector<8x1xf32>
    %184 = vector.broadcast %183 : vector<8x1xf32> to vector<8x128xf32>
    %185 = arith.subf %181, %184 : vector<8x128xf32>
    %186 = math.exp %185 : vector<8x128xf32>
    %cst_33 = arith.constant dense<0.000000e+00> : vector<8xf32>
    %187 = vector.multi_reduction <add>, %186, %cst_33 [1] : vector<8x128xf32> to vector<8xf32>
    %188 = vector.shape_cast %187 : vector<8xf32> to vector<8x1xf32>
    %189 = vector.broadcast %188 : vector<8x1xf32> to vector<8x128xf32>
    %190 = arith.divf %186, %189 : vector<8x128xf32>
    %c0_34 = arith.constant 0 : index
    %c0_35 = arith.constant 0 : index
    %191 = vector.load %arg6[%c0_34, %c0_35] : memref<8x128xf32, #tpu.memory_space<vmem>>, vector<8x128xf32>
    tpu.vector_store %arg6[%c0_34, %c0_35], %190 {strides = array<i32>} : memref<8x128xf32, #tpu.memory_space<vmem>>, vector<8x128xf32>,
    return
  }
}

</mosaic_0001>

<llo_original>
// kernel: pytorch_model_forward.1
$region0: #{pytorch_model_forward.1}
  #allocation0 [shape = 'u32[]', space=smem, size = 0x4, offset = 0x4, fixed_abs, tag = 'smem constant byte address 0x4 - core index']
  #allocation1 [shape = 'u32[144,128]{1,0:T(1,128)}', space=vmem, size = 0x12000, scoped, tag = 'internal scratch']
  %s0 = inlined_call_operand.vmem [shape: s32[64,1], index: 0, kind: input, shape index: {}]
  %s1 = inlined_call_operand.vmem [shape: bf16[128,512], index: 1, kind: input, shape index: {}]
  %s2 = inlined_call_operand.vmem [shape: bf16[128,512], index: 2, kind: input, shape index: {}]
  %s3 = inlined_call_operand.vmem [shape: f32[1,512], index: 3, kind: input, shape index: {}]
  %s4 = inlined_call_operand.vmem [shape: bf16[128,128], index: 4, kind: input, shape index: {}]
  %s5 = inlined_call_operand.vmem [shape: f32[1,128], index: 5, kind: input, shape index: {}]
  %s6 = inlined_call_operand.hbm [shape: f32[8,128], index: 6, kind: output, shape index: {}]
  %s7 = sld [smem:[#allocation0]]
  $region34: #{pytorch_model_forward.1} parent=0
    _
  %s9 = ssub.s32 1, %s7
  %s10 = scalar_select 0, %s9, %s7
  $region1: #{pytorch_model_forward.1} parent=0
    #allocation2 [shape = 'u8[4096]{0}', space=vmem, size = 0x1000, scoped, tag = 'output window, operand 0, single buffered']
    #allocation3 [shape = 's32[1]{0}', space=sflag, size = 0x4, scoped, tag = 'scoped memory for pytorch_model_forward.1']
    %11 = vsyncpa [#allocation3], 0
    // Predicated region
    $region2: #{pytorch_model_forward.1} parent=1 // pred_check
      _
    $region3: #{pytorch_model_forward.1} parent=1 // pred_check_branch
      %13 = sbr.rel (0) target = $region5
    $region4: #{pytorch_model_forward.1} parent=1 // pred_region
      _
    $region5: #{pytorch_model_forward.1} parent=1 // pred_fallthru
      _
    // Predicated region
    $region6: #{pytorch_model_forward.1} parent=1 // pred_check
      _
    $region7: #{pytorch_model_forward.1} parent=1 // pred_check_branch
      %15 = sbr.rel (0) target = $region9
    $region8: #{pytorch_model_forward.1} parent=1 // pred_region
      _
    $region9: #{pytorch_model_forward.1} parent=1 // pred_fallthru
      _
    // Predicated region
    $region10: #{pytorch_model_forward.1} parent=1 // pred_check
      _
    $region11: #{pytorch_model_forward.1} parent=1 // pred_check_branch
      %17 = sbr.rel (0) target = $region13
    $region12: #{pytorch_model_forward.1} parent=1 // pred_region
      _
    $region13: #{pytorch_model_forward.1} parent=1 // pred_fallthru
      _
    // Predicated region
    $region14: #{pytorch_model_forward.1} parent=1 // pred_check
      _
    $region15: #{pytorch_model_forward.1} parent=1 // pred_check_branch
      %19 = sbr.rel (0) target = $region17
    $region16: #{pytorch_model_forward.1} parent=1 // pred_region
      _
    $region17: #{pytorch_model_forward.1} parent=1 // pred_fallthru
      _
    // Predicated region
    $region18: #{pytorch_model_forward.1} parent=1 // pred_check
      _
    $region19: #{pytorch_model_forward.1} parent=1 // pred_check_branch
      %21 = sbr.rel (0) target = $region21
    $region20: #{pytorch_model_forward.1} parent=1 // pred_region
      _
    $region21: #{pytorch_model_forward.1} parent=1 // pred_fallthru
      _
    // Predicated region
    $region22: #{pytorch_model_forward.1} parent=1 // pred_check
      _
    $region23: #{pytorch_model_forward.1} parent=1 // pred_check_branch
      %23 = sbr.rel (0) target = $region25
    $region24: #{pytorch_model_forward.1} parent=1 // pred_region
      _
    $region25: #{pytorch_model_forward.1} parent=1 // pred_fallthru
      _
    %v25 = vld [vmem:[%s0] sm:$0xff]
    %v26 = vld [vmem:[%s0 + $0x8] sm:$0xff]
    %v27 = vld [vmem:[%s0 + $0x10] sm:$0xff]
    %v28 = vld [vmem:[%s0 + $0x18] sm:$0xff]
    %v29 = vld [vmem:[%s0 + $0x20] sm:$0xff]
    %v30 = vld [vmem:[%s0 + $0x28] sm:$0xff]
    %v31 = vld [vmem:[%s0 + $0x30] sm:$0xff]
    %v32 = vld [vmem:[%s0 + $0x38] sm:$0xff]
    %v33 = vlaneseq
    %v34 = vand.u32 %v33, 127
    %35 = vset.pattern.permute.xlu0 0
    %36 = vperm.xlu0 %35, %v25
    %v37 = vpop.permute.xlu0 %36
    %38 = vset.pattern.permute.xlu0 0
    %39 = vperm.xlu0 %38, %v26
    %v40 = vpop.permute.xlu0 %39
    %41 = vset.pattern.permute.xlu0 0
    %42 = vperm.xlu0 %41, %v27
    %v43 = vpop.permute.xlu0 %42
    %44 = vset.pattern.permute.xlu0 0
    %45 = vperm.xlu0 %44, %v28
    %v46 = vpop.permute.xlu0 %45
    %47 = vset.pattern.permute.xlu0 0
    %48 = vperm.xlu0 %47, %v29
    %v49 = vpop.permute.xlu0 %48
    %50 = vset.pattern.permute.xlu0 0
    %51 = vperm.xlu0 %50, %v30
    %v52 = vpop.permute.xlu0 %51
    %53 = vset.pattern.permute.xlu0 0
    %54 = vperm.xlu0 %53, %v31
    %v55 = vpop.permute.xlu0 %54
    %56 = vset.pattern.permute.xlu0 0
    %57 = vperm.xlu0 %56, %v32
    %v58 = vpop.permute.xlu0 %57
    %vm59 = vcmp.eq.s32.totalorder %v34, %v37
    %vm60 = vcmp.eq.s32.totalorder %v34, %v40
    %vm61 = vcmp.eq.s32.totalorder %v34, %v43
    %vm62 = vcmp.eq.s32.totalorder %v34, %v46
    %vm63 = vcmp.eq.s32.totalorder %v34, %v49
    %vm64 = vcmp.eq.s32.totalorder %v34, %v52
    %vm65 = vcmp.eq.s32.totalorder %v34, %v55
    %vm66 = vcmp.eq.s32.totalorder %v34, %v58
    %v67 = vsel %vm59, 1.0, 0.0
    %v68 = vsel %vm60, 1.0, 0.0
    %v69 = vsel %vm61, 1.0, 0.0
    %v70 = vsel %vm62, 1.0, 0.0
    %v71 = vsel %vm63, 1.0, 0.0
    %v72 = vsel %vm64, 1.0, 0.0
    %v73 = vsel %vm65, 1.0, 0.0
    %v74 = vsel %vm66, 1.0, 0.0
    %v75 = vpack.c.bf16 %v68, %v67
    %v76 = vpack.c.bf16 %v70, %v69
    %v77 = vpack.c.bf16 %v72, %v71
    %v78 = vpack.c.bf16 %v74, %v73
    %v79 = vld [vmem:[%s1] sm:$0xff]
    %v80 = vld [vmem:[%s1 + $0x8] sm:$0xff]
    %v81 = vld [vmem:[%s1 + $0x10] sm:$0xff]
    %v82 = vld [vmem:[%s1 + $0x18] sm:$0xff]
    %v83 = vld [vmem:[%s1 + $0x20] sm:$0xff]
    %v84 = vld [vmem:[%s1 + $0x28] sm:$0xff]
    %v85 = vld [vmem:[%s1 + $0x30] sm:$0xff]
    %v86 = vld [vmem:[%s1 + $0x38] sm:$0xff]
    %v87 = vld [vmem:[%s1 + $0x40] sm:$0xff]
    %v88 = vld [vmem:[%s1 + $0x48] sm:$0xff]
    %v89 = vld [vmem:[%s1 + $0x50] sm:$0xff]
    %v90 = vld [vmem:[%s1 + $0x58] sm:$0xff]
    %v91 = vld [vmem:[%s1 + $0x60] sm:$0xff]
    %v92 = vld [vmem:[%s1 + $0x68] sm:$0xff]
    %v93 = vld [vmem:[%s1 + $0x70] sm:$0xff]
    %v94 = vld [vmem:[%s1 + $0x78] sm:$0xff]
    %v95 = vld [vmem:[%s1 + $0x80] sm:$0xff]
    %v96 = vld [vmem:[%s1 + $0x88] sm:$0xff]
    %v97 = vld [vmem:[%s1 + $0x90] sm:$0xff]
    %v98 = vld [vmem:[%s1 + $0x98] sm:$0xff]
    %v99 = vld [vmem:[%s1 + $0xa0] sm:$0xff]
    %v100 = vld [vmem:[%s1 + $0xa8] sm:$0xff]
    %v101 = vld [vmem:[%s1 + $0xb0] sm:$0xff]
    %v102 = vld [vmem:[%s1 + $0xb8] sm:$0xff]
    %v103 = vld [vmem:[%s1 + $0xc0] sm:$0xff]
    %v104 = vld [vmem:[%s1 + $0xc8] sm:$0xff]
    %v105 = vld [vmem:[%s1 + $0xd0] sm:$0xff]
    %v106 = vld [vmem:[%s1 + $0xd8] sm:$0xff]
    %v107 = vld [vmem:[%s1 + $0xe0] sm:$0xff]
    %v108 = vld [vmem:[%s1 + $0xe8] sm:$0xff]
    %v109 = vld [vmem:[%s1 + $0xf0] sm:$0xff]
    %v110 = vld [vmem:[%s1 + $0xf8] sm:$0xff]
    %v111 = vld [vmem:[%s3] sm:$0xf]
    %v113 = vlaneseq
    %v114 = vshrl.u32 %v113, 7
    %v115 = vsub.s32 0, %v114
    %v116 = vrot.slane %v111, %v115
    %v117 = vlaneseq
    %v118 = vshrl.u32 %v117, 7
    %v119 = vsub.s32 1, %v118
    %v120 = vrot.slane %v111, %v119
    %v121 = vlaneseq
    %v122 = vshrl.u32 %v121, 7
    %v123 = vsub.s32 2, %v122
    %v124 = vrot.slane %v111, %v123
    %v125 = vlaneseq
    %v126 = vshrl.u32 %v125, 7
    %v127 = vsub.s32 3, %v126
    %v128 = vrot.slane %v111, %v127
    %v165 = vunpack.c.l.b16 %v79
    %v166 = vunpack.c.h.b16 %v79
    %v167 = vunpack.c.l.b16 %v80
    %v168 = vunpack.c.h.b16 %v80
    %v169 = vunpack.c.l.b16 %v81
    %v170 = vunpack.c.h.b16 %v81
    %v171 = vunpack.c.l.b16 %v82
    %v172 = vunpack.c.h.b16 %v82
    %v173 = vunpack.c.l.b16 %v83
    %v174 = vunpack.c.h.b16 %v83
    %v175 = vunpack.c.l.b16 %v84
    %v176 = vunpack.c.h.b16 %v84
    %v177 = vunpack.c.l.b16 %v85
    %v178 = vunpack.c.h.b16 %v85
    %v179 = vunpack.c.l.b16 %v86
    %v180 = vunpack.c.h.b16 %v86
    %v181 = vunpack.c.l.b16 %v87
    %v182 = vunpack.c.h.b16 %v87
    %v183 = vunpack.c.l.b16 %v88
    %v184 = vunpack.c.h.b16 %v88
    %v185 = vunpack.c.l.b16 %v89
    %v186 = vunpack.c.h.b16 %v89
    %v187 = vunpack.c.l.b16 %v90
    %v188 = vunpack.c.h.b16 %v90
    %v189 = vunpack.c.l.b16 %v91
    %v190 = vunpack.c.h.b16 %v91
    %v191 = vunpack.c.l.b16 %v92
    %v192 = vunpack.c.h.b16 %v92
    %v193 = vunpack.c.l.b16 %v93
    %v194 = vunpack.c.h.b16 %v93
    %v195 = vunpack.c.l.b16 %v94
    %v196 = vunpack.c.h.b16 %v94
    %v197 = vunpack.c.l.b16 %v95
    %v198 = vunpack.c.h.b16 %v95
    %v199 = vunpack.c.l.b16 %v96
    %v200 = vunpack.c.h.b16 %v96
    %v201 = vunpack.c.l.b16 %v97
    %v202 = vunpack.c.h.b16 %v97
    %v203 = vunpack.c.l.b16 %v98
    %v204 = vunpack.c.h.b16 %v98
    %v205 = vunpack.c.l.b16 %v99
    %v206 = vunpack.c.h.b16 %v99
    %v207 = vunpack.c.l.b16 %v100
    %v208 = vunpack.c.h.b16 %v100
    %v209 = vunpack.c.l.b16 %v101
    %v210 = vunpack.c.h.b16 %v101
    %v211 = vunpack.c.l.b16 %v102
    %v212 = vunpack.c.h.b16 %v102
    %v213 = vunpack.c.l.b16 %v103
    %v214 = vunpack.c.h.b16 %v103
    %v215 = vunpack.c.l.b16 %v104
    %v216 = vunpack.c.h.b16 %v104
    %v217 = vunpack.c.l.b16 %v105
    %v218 = vunpack.c.h.b16 %v105
    %v219 = vunpack.c.l.b16 %v106
    %v220 = vunpack.c.h.b16 %v106
    %v221 = vunpack.c.l.b16 %v107
    %v222 = vunpack.c.h.b16 %v107
    %v223 = vunpack.c.l.b16 %v108
    %v224 = vunpack.c.h.b16 %v108
    %v225 = vunpack.c.l.b16 %v109
    %v226 = vunpack.c.h.b16 %v109
    %v227 = vunpack.c.l.b16 %v110
    %v228 = vunpack.c.h.b16 %v110
    %v229 = vpack.c.b16 %v169, %v165
    %v230 = vpack.c.b16 %v170, %v166
    %v231 = vpack.c.b16 %v171, %v167
    %v232 = vpack.c.b16 %v172, %v168
    %v233 = vpack.c.b16 %v177, %v173
    %v234 = vpack.c.b16 %v178, %v174
    %v235 = vpack.c.b16 %v179, %v175
    %v236 = vpack.c.b16 %v180, %v176
    %v237 = vpack.c.b16 %v185, %v181
    %v238 = vpack.c.b16 %v186, %v182
    %v239 = vpack.c.b16 %v187, %v183
    %v240 = vpack.c.b16 %v188, %v184
    %v241 = vpack.c.b16 %v193, %v189
    %v242 = vpack.c.b16 %v194, %v190
    %v243 = vpack.c.b16 %v195, %v191
    %v244 = vpack.c.b16 %v196, %v192
    %v245 = vpack.c.b16 %v201, %v197
    %v246 = vpack.c.b16 %v202, %v198
    %v247 = vpack.c.b16 %v203, %v199
    %v248 = vpack.c.b16 %v204, %v200
    %v249 = vpack.c.b16 %v209, %v205
    %v250 = vpack.c.b16 %v210, %v206
    %v251 = vpack.c.b16 %v211, %v207
    %v252 = vpack.c.b16 %v212, %v208
    %v253 = vpack.c.b16 %v217, %v213
    %v254 = vpack.c.b16 %v218, %v214
    %v255 = vpack.c.b16 %v219, %v215
    %v256 = vpack.c.b16 %v220, %v216
    %v257 = vpack.c.b16 %v225, %v221
    %v258 = vpack.c.b16 %v226, %v222
    %v259 = vpack.c.b16 %v227, %v223
    %v260 = vpack.c.b16 %v228, %v224
    %293 = vmatprep.subr.bf16.mxu0 %v230
    %294 = vmatpush1.bf16.msra.mxu0 %v229
    %295 = vmatprep.subr.bf16.mxu0 %v234
    %296 = vmatpush1.bf16.msra.mxu0 %v233
    %297 = vmatprep.subr.bf16.mxu0 %v238
    %298 = vmatpush1.bf16.msra.mxu0 %v237
    %299 = vmatprep.subr.bf16.mxu0 %v242
    %300 = vmatpush1.bf16.msra.mxu0 %v241
    %301 = vmatprep.subr.bf16.mxu0 %v246
    %302 = vmatpush1.bf16.msra.mxu0 %v245
    %303 = vmatprep.subr.bf16.mxu0 %v250
    %304 = vmatpush1.bf16.msra.mxu0 %v249
    %305 = vmatprep.subr.bf16.mxu0 %v254
    %306 = vmatpush1.bf16.msra.mxu0 %v253
    %307 = vmatprep.subr.bf16.mxu0 %v258
    %308 = vmatpush1.bf16.msra.mxu0 %v257
    %309 = vmatprep.subr.bf16.mxu0 0
    %310 = vmatpush1.bf16.msra.mxu0 0
    %311 = vmatprep.subr.bf16.mxu0 0
    %312 = vmatpush1.bf16.msra.mxu0 0
    %313 = vmatprep.subr.bf16.mxu0 0
    %314 = vmatpush1.bf16.msra.mxu0 0
    %315 = vmatprep.subr.bf16.mxu0 0
    %316 = vmatpush1.bf16.msra.mxu0 0
    %317 = vmatprep.subr.bf16.mxu0 0
    %318 = vmatpush1.bf16.msra.mxu0 0
    %319 = vmatprep.subr.bf16.mxu0 0
    %320 = vmatpush1.bf16.msra.mxu0 0
    %321 = vmatprep.subr.bf16.mxu0 0
    %322 = vmatpush1.bf16.msra.mxu0 0
    %323 = vmatprep.subr.bf16.mxu0 0
    %324 = vmatpush1.bf16.msra.mxu0 0
    %325 = vmatprep.mubr.bf16.mxu0 0
    %326 = vmatmul.mubr.bf16.gmra.mrb[0].mxu0 %v75
    %v327 = vpop.f32.mrb[0].mxu0
    %v328 = vadd.f32 %v116, %v327
    %v329 = vpop.f32.mrb[0].mxu0
    %v330 = vadd.f32 %v120, %v329
    %v331 = vpop.f32.mrb[0].mxu0
    %v332 = vadd.f32 %v116, %v331
    %v333 = vpop.f32.mrb[0].mxu0
    %v334 = vadd.f32 %v120, %v333
    %335 = vmatprep.mubr.bf16.mxu0 0
    %336 = vmatmul.mubr.bf16.gmra.mrb[0].mxu0 %v76
    %v337 = vpop.f32.mrb[0].mxu0
    %v338 = vadd.f32 %v116, %v337
    %v339 = vpop.f32.mrb[0].mxu0
    %v340 = vadd.f32 %v120, %v339
    %v341 = vpop.f32.mrb[0].mxu0
    %v342 = vadd.f32 %v116, %v341
    %v343 = vpop.f32.mrb[0].mxu0
    %v344 = vadd.f32 %v120, %v343
    %345 = vmatprep.mubr.bf16.mxu0 0
    %346 = vmatmul.mubr.bf16.gmra.mrb[0].mxu0 %v77
    %v347 = vpop.f32.mrb[0].mxu0
    %v348 = vadd.f32 %v116, %v347
    %v349 = vpop.f32.mrb[0].mxu0
    %v350 = vadd.f32 %v120, %v349
    %v351 = vpop.f32.mrb[0].mxu0
    %v352 = vadd.f32 %v116, %v351
    %v353 = vpop.f32.mrb[0].mxu0
    %v354 = vadd.f32 %v120, %v353
    %355 = vmatprep.mubr.bf16.mxu0 0
    %356 = vmatmul.mubr.bf16.gmra.mrb[0].mxu0 %v78
    %v357 = vpop.f32.mrb[0].mxu0
    %v358 = vadd.f32 %v116, %v357
    %v359 = vpop.f32.mrb[0].mxu0
    %v360 = vadd.f32 %v120, %v359
    %v361 = vpop.f32.mrb[0].mxu0
    %v362 = vadd.f32 %v116, %v361
    %v363 = vpop.f32.mrb[0].mxu0
    %v364 = vadd.f32 %v120, %v363
    %365 = vdwg.mxu0
    %366 = vmatprep.subr.bf16.mxu0 %v232
    %367 = vmatpush1.bf16.msra.mxu0 %v231
    %368 = vmatprep.subr.bf16.mxu0 %v236
    %369 = vmatpush1.bf16.msra.mxu0 %v235
    %370 = vmatprep.subr.bf16.mxu0 %v240
    %371 = vmatpush1.bf16.msra.mxu0 %v239
    %372 = vmatprep.subr.bf16.mxu0 %v244
    %373 = vmatpush1.bf16.msra.mxu0 %v243
    %374 = vmatprep.subr.bf16.mxu0 %v248
    %375 = vmatpush1.bf16.msra.mxu0 %v247
    %376 = vmatprep.subr.bf16.mxu0 %v252
    %377 = vmatpush1.bf16.msra.mxu0 %v251
    %378 = vmatprep.subr.bf16.mxu0 %v256
    %379 = vmatpush1.bf16.msra.mxu0 %v255
    %380 = vmatprep.subr.bf16.mxu0 %v260
    %381 = vmatpush1.bf16.msra.mxu0 %v259
    %382 = vmatprep.subr.bf16.mxu0 0
    %383 = vmatpush1.bf16.msra.mxu0 0
    %384 = vmatprep.subr.bf16.mxu0 0
    %385 = vmatpush1.bf16.msra.mxu0 0
    %386 = vmatprep.subr.bf16.mxu0 0
    %387 = vmatpush1.bf16.msra.mxu0 0
    %388 = vmatprep.subr.bf16.mxu0 0
    %389 = vmatpush1.bf16.msra.mxu0 0
    %390 = vmatprep.subr.bf16.mxu0 0
    %391 = vmatpush1.bf16.msra.mxu0 0
    %392 = vmatprep.subr.bf16.mxu0 0
    %393 = vmatpush1.bf16.msra.mxu0 0
    %394 = vmatprep.subr.bf16.mxu0 0
    %395 = vmatpush1.bf16.msra.mxu0 0
    %396 = vmatprep.subr.bf16.mxu0 0
    %397 = vmatpush1.bf16.msra.mxu0 0
    %398 = vmatprep.mubr.bf16.mxu0 0
    %399 = vmatmul.mubr.bf16.gmra.mrb[0].mxu0 %v75
    %v400 = vpop.f32.mrb[0].mxu0
    %v401 = vadd.f32 %v124, %v400
    %v402 = vpop.f32.mrb[0].mxu0
    %v403 = vadd.f32 %v128, %v402
    %v404 = vpop.f32.mrb[0].mxu0
    %v405 = vadd.f32 %v124, %v404
    %v406 = vpop.f32.mrb[0].mxu0
    %v407 = vadd.f32 %v128, %v406
    %408 = vmatprep.mubr.bf16.mxu0 0
    %409 = vmatmul.mubr.bf16.gmra.mrb[0].mxu0 %v76
    %v410 = vpop.f32.mrb[0].mxu0
    %v411 = vadd.f32 %v124, %v410
    %v412 = vpop.f32.mrb[0].mxu0
    %v413 = vadd.f32 %v128, %v412
    %v414 = vpop.f32.mrb[0].mxu0
    %v415 = vadd.f32 %v124, %v414
    %v416 = vpop.f32.mrb[0].mxu0
    %v417 = vadd.f32 %v128, %v416
    %418 = vmatprep.mubr.bf16.mxu0 0
    %419 = vmatmul.mubr.bf16.gmra.mrb[0].mxu0 %v77
    %v420 = vpop.f32.mrb[0].mxu0
    %v421 = vadd.f32 %v124, %v420
    %v422 = vpop.f32.mrb[0].mxu0
    %v423 = vadd.f32 %v128, %v422
    %v424 = vpop.f32.mrb[0].mxu0
    %v425 = vadd.f32 %v124, %v424
    %v426 = vpop.f32.mrb[0].mxu0
    %v427 = vadd.f32 %v128, %v426
    %428 = vmatprep.mubr.bf16.mxu0 0
    %429 = vmatmul.mubr.bf16.gmra.mrb[0].mxu0 %v78
    %v430 = vpop.f32.mrb[0].mxu0
    %v431 = vadd.f32 %v124, %v430
    %v432 = vpop.f32.mrb[0].mxu0
    %v433 = vadd.f32 %v128, %v432
    %v434 = vpop.f32.mrb[0].mxu0
    %v435 = vadd.f32 %v124, %v434
    %v436 = vpop.f32.mrb[0].mxu0
    %v437 = vadd.f32 %v128, %v436
    %438 = vdwg.mxu0
    %v439 = vld [vmem:[%s2] sm:$0xff]
    %v440 = vld [vmem:[%s2 + $0x8] sm:$0xff]
    %v441 = vld [vmem:[%s2 + $0x10] sm:$0xff]
    %v442 = vld [vmem:[%s2 + $0x18] sm:$0xff]
    %v443 = vld [vmem:[%s2 + $0x20] sm:$0xff]
    %v444 = vld [vmem:[%s2 + $0x28] sm:$0xff]
    %v445 = vld [vmem:[%s2 + $0x30] sm:$0xff]
    %v446 = vld [vmem:[%s2 + $0x38] sm:$0xff]
    %v447 = vld [vmem:[%s2 + $0x40] sm:$0xff]
    %v448 = vld [vmem:[%s2 + $0x48] sm:$0xff]
    %v449 = vld [vmem:[%s2 + $0x50] sm:$0xff]
    %v450 = vld [vmem:[%s2 + $0x58] sm:$0xff]
    %v451 = vld [vmem:[%s2 + $0x60] sm:$0xff]
    %v452 = vld [vmem:[%s2 + $0x68] sm:$0xff]
    %v453 = vld [vmem:[%s2 + $0x70] sm:$0xff]
    %v454 = vld [vmem:[%s2 + $0x78] sm:$0xff]
    %v455 = vld [vmem:[%s2 + $0x80] sm:$0xff]
    %v456 = vld [vmem:[%s2 + $0x88] sm:$0xff]
    %v457 = vld [vmem:[%s2 + $0x90] sm:$0xff]
    %v458 = vld [vmem:[%s2 + $0x98] sm:$0xff]
    %v459 = vld [vmem:[%s2 + $0xa0] sm:$0xff]
    %v460 = vld [vmem:[%s2 + $0xa8] sm:$0xff]
    %v461 = vld [vmem:[%s2 + $0xb0] sm:$0xff]
    %v462 = vld [vmem:[%s2 + $0xb8] sm:$0xff]
    %v463 = vld [vmem:[%s2 + $0xc0] sm:$0xff]
    %v464 = vld [vmem:[%s2 + $0xc8] sm:$0xff]
    %v465 = vld [vmem:[%s2 + $0xd0] sm:$0xff]
    %v466 = vld [vmem:[%s2 + $0xd8] sm:$0xff]
    %v467 = vld [vmem:[%s2 + $0xe0] sm:$0xff]
    %v468 = vld [vmem:[%s2 + $0xe8] sm:$0xff]
    %v469 = vld [vmem:[%s2 + $0xf0] sm:$0xff]
    %v470 = vld [vmem:[%s2 + $0xf8] sm:$0xff]
    %v503 = vunpack.c.l.b16 %v439
    %v504 = vunpack.c.h.b16 %v439
    %v505 = vunpack.c.l.b16 %v440
    %v506 = vunpack.c.h.b16 %v440
    %v507 = vunpack.c.l.b16 %v441
    %v508 = vunpack.c.h.b16 %v441
    %v509 = vunpack.c.l.b16 %v442
    %v510 = vunpack.c.h.b16 %v442
    %v511 = vunpack.c.l.b16 %v443
    %v512 = vunpack.c.h.b16 %v443
    %v513 = vunpack.c.l.b16 %v444
    %v514 = vunpack.c.h.b16 %v444
    %v515 = vunpack.c.l.b16 %v445
    %v516 = vunpack.c.h.b16 %v445
    %v517 = vunpack.c.l.b16 %v446
    %v518 = vunpack.c.h.b16 %v446
    %v519 = vunpack.c.l.b16 %v447
    %v520 = vunpack.c.h.b16 %v447
    %v521 = vunpack.c.l.b16 %v448
    %v522 = vunpack.c.h.b16 %v448
    %v523 = vunpack.c.l.b16 %v449
    %v524 = vunpack.c.h.b16 %v449
    %v525 = vunpack.c.l.b16 %v450
    %v526 = vunpack.c.h.b16 %v450
    %v527 = vunpack.c.l.b16 %v451
    %v528 = vunpack.c.h.b16 %v451
    %v529 = vunpack.c.l.b16 %v452
    %v530 = vunpack.c.h.b16 %v452
    %v531 = vunpack.c.l.b16 %v453
    %v532 = vunpack.c.h.b16 %v453
    %v533 = vunpack.c.l.b16 %v454
    %v534 = vunpack.c.h.b16 %v454
    %v535 = vunpack.c.l.b16 %v455
    %v536 = vunpack.c.h.b16 %v455
    %v537 = vunpack.c.l.b16 %v456
    %v538 = vunpack.c.h.b16 %v456
    %v539 = vunpack.c.l.b16 %v457
    %v540 = vunpack.c.h.b16 %v457
    %v541 = vunpack.c.l.b16 %v458
    %v542 = vunpack.c.h.b16 %v458
    %v543 = vunpack.c.l.b16 %v459
    %v544 = vunpack.c.h.b16 %v459
    %v545 = vunpack.c.l.b16 %v460
    %v546 = vunpack.c.h.b16 %v460
    %v547 = vunpack.c.l.b16 %v461
    %v548 = vunpack.c.h.b16 %v461
    %v549 = vunpack.c.l.b16 %v462
    %v550 = vunpack.c.h.b16 %v462
    %v551 = vunpack.c.l.b16 %v463
    %v552 = vunpack.c.h.b16 %v463
    %v553 = vunpack.c.l.b16 %v464
    %v554 = vunpack.c.h.b16 %v464
    %v555 = vunpack.c.l.b16 %v465
    %v556 = vunpack.c.h.b16 %v465
    %v557 = vunpack.c.l.b16 %v466
    %v558 = vunpack.c.h.b16 %v466
    %v559 = vunpack.c.l.b16 %v467
    %v560 = vunpack.c.h.b16 %v467
    %v561 = vunpack.c.l.b16 %v468
    %v562 = vunpack.c.h.b16 %v468
    %v563 = vunpack.c.l.b16 %v469
    %v564 = vunpack.c.h.b16 %v469
    %v565 = vunpack.c.l.b16 %v470
    %v566 = vunpack.c.h.b16 %v470
    %v567 = vpack.c.b16 %v507, %v503
    %v568 = vpack.c.b16 %v508, %v504
    %v569 = vpack.c.b16 %v509, %v505
    %v570 = vpack.c.b16 %v510, %v506
    %v571 = vpack.c.b16 %v515, %v511
    %v572 = vpack.c.b16 %v516, %v512
    %v573 = vpack.c.b16 %v517, %v513
    %v574 = vpack.c.b16 %v518, %v514
    %v575 = vpack.c.b16 %v523, %v519
    %v576 = vpack.c.b16 %v524, %v520
    %v577 = vpack.c.b16 %v525, %v521
    %v578 = vpack.c.b16 %v526, %v522
    %v579 = vpack.c.b16 %v531, %v527
    %v580 = vpack.c.b16 %v532, %v528
    %v581 = vpack.c.b16 %v533, %v529
    %v582 = vpack.c.b16 %v534, %v530
    %v583 = vpack.c.b16 %v539, %v535
    %v584 = vpack.c.b16 %v540, %v536
    %v585 = vpack.c.b16 %v541, %v537
    %v586 = vpack.c.b16 %v542, %v538
    %v587 = vpack.c.b16 %v547, %v543
    %v588 = vpack.c.b16 %v548, %v544
    %v589 = vpack.c.b16 %v549, %v545
    %v590 = vpack.c.b16 %v550, %v546
    %v591 = vpack.c.b16 %v555, %v551
    %v592 = vpack.c.b16 %v556, %v552
    %v593 = vpack.c.b16 %v557, %v553
    %v594 = vpack.c.b16 %v558, %v554
    %v595 = vpack.c.b16 %v563, %v559
    %v596 = vpack.c.b16 %v564, %v560
    %v597 = vpack.c.b16 %v565, %v561
    %v598 = vpack.c.b16 %v566, %v562
    %631 = vmatprep.subr.bf16.mxu0 %v568
    %632 = vmatpush1.bf16.msra.mxu0 %v567
    %633 = vmatprep.subr.bf16.mxu0 %v572
    %634 = vmatpush1.bf16.msra.mxu0 %v571
    %635 = vmatprep.subr.bf16.mxu0 %v576
    %636 = vmatpush1.bf16.msra.mxu0 %v575
    %637 = vmatprep.subr.bf16.mxu0 %v580
    %638 = vmatpush1.bf16.msra.mxu0 %v579
    %639 = vmatprep.subr.bf16.mxu0 %v584
    %640 = vmatpush1.bf16.msra.mxu0 %v583
    %641 = vmatprep.subr.bf16.mxu0 %v588
    %642 = vmatpush1.bf16.msra.mxu0 %v587
    %643 = vmatprep.subr.bf16.mxu0 %v592
    %644 = vmatpush1.bf16.msra.mxu0 %v591
    %645 = vmatprep.subr.bf16.mxu0 %v596
    %646 = vmatpush1.bf16.msra.mxu0 %v595
    %647 = vmatprep.subr.bf16.mxu0 0
    %648 = vmatpush1.bf16.msra.mxu0 0
    %649 = vmatprep.subr.bf16.mxu0 0
    %650 = vmatpush1.bf16.msra.mxu0 0
    %651 = vmatprep.subr.bf16.mxu0 0
    %652 = vmatpush1.bf16.msra.mxu0 0
    %653 = vmatprep.subr.bf16.mxu0 0
    %654 = vmatpush1.bf16.msra.mxu0 0
    %655 = vmatprep.subr.bf16.mxu0 0
    %656 = vmatpush1.bf16.msra.mxu0 0
    %657 = vmatprep.subr.bf16.mxu0 0
    %658 = vmatpush1.bf16.msra.mxu0 0
    %659 = vmatprep.subr.bf16.mxu0 0
    %660 = vmatpush1.bf16.msra.mxu0 0
    %661 = vmatprep.subr.bf16.mxu0 0
    %662 = vmatpush1.bf16.msra.mxu0 0
    %663 = vmatprep.mubr.bf16.mxu0 0
    %664 = vmatmul.mubr.bf16.gmra.mrb[0].mxu0 0
    %v665 = vpop.f32.mrb[0].mxu0
    %v666 = vadd.f32 0.0, %v665
    %v667 = vpop.f32.mrb[0].mxu0
    %v668 = vadd.f32 0.0, %v667
    %v669 = vpop.f32.mrb[0].mxu0
    %v670 = vpop.f32.mrb[0].mxu0
    %671 = vdwg.mxu0
    %672 = vmatprep.subr.bf16.mxu0 %v570
    %673 = vmatpush1.bf16.msra.mxu0 %v569
    %674 = vmatprep.subr.bf16.mxu0 %v574
    %675 = vmatpush1.bf16.msra.mxu0 %v573
    %676 = vmatprep.subr.bf16.mxu0 %v578
    %677 = vmatpush1.bf16.msra.mxu0 %v577
    %678 = vmatprep.subr.bf16.mxu0 %v582
    %679 = vmatpush1.bf16.msra.mxu0 %v581
    %680 = vmatprep.subr.bf16.mxu0 %v586
    %681 = vmatpush1.bf16.msra.mxu0 %v585
    %682 = vmatprep.subr.bf16.mxu0 %v590
    %683 = vmatpush1.bf16.msra.mxu0 %v589
    %684 = vmatprep.subr.bf16.mxu0 %v594
    %685 = vmatpush1.bf16.msra.mxu0 %v593
    %686 = vmatprep.subr.bf16.mxu0 %v598
    %687 = vmatpush1.bf16.msra.mxu0 %v597
    %688 = vmatprep.subr.bf16.mxu0 0
    %689 = vmatpush1.bf16.msra.mxu0 0
    %690 = vmatprep.subr.bf16.mxu0 0
    %691 = vmatpush1.bf16.msra.mxu0 0
    %692 = vmatprep.subr.bf16.mxu0 0
    %693 = vmatpush1.bf16.msra.mxu0 0
    %694 = vmatprep.subr.bf16.mxu0 0
    %695 = vmatpush1.bf16.msra.mxu0 0
    %696 = vmatprep.subr.bf16.mxu0 0
    %697 = vmatpush1.bf16.msra.mxu0 0
    %698 = vmatprep.subr.bf16.mxu0 0
    %699 = vmatpush1.bf16.msra.mxu0 0
    %700 = vmatprep.subr.bf16.mxu0 0
    %701 = vmatpush1.bf16.msra.mxu0 0
    %702 = vmatprep.subr.bf16.mxu0 0
    %703 = vmatpush1.bf16.msra.mxu0 0
    %704 = vmatprep.mubr.bf16.mxu0 0
    %705 = vmatmul.mubr.bf16.gmra.mrb[0].mxu0 0
    %v706 = vpop.f32.mrb[0].mxu0
    %v707 = vadd.f32 0.0, %v706
    %v708 = vpop.f32.mrb[0].mxu0
    %v709 = vadd.f32 0.0, %v708
    %v710 = vpop.f32.mrb[0].mxu0
    %v711 = vpop.f32.mrb[0].mxu0
    %712 = vdwg.mxu0
    %v713 = vadd.f32 %v328, %v666
    %v714 = vadd.f32 %v330, %v668
    %v715 = vadd.f32 %v401, %v707
    %v716 = vadd.f32 %v403, %v709
    %v717 = vxor.u32 %v713, 2147483648
    %v718 = vxor.u32 %v714, 2147483648
    %v719 = vxor.u32 %v715, 2147483648
    %v720 = vmul.f32 %v717, 1.442695
    %v721 = vpow.pop %v720
    %v722 = vmul.f32 %v718, 1.442695
    %v723 = vpow.pop %v722
    %v724 = vmul.f32 %v719, 1.442695
    %v725 = vpow.pop %v724
    %v726 = vadd.f32 %v721, 1.0
    %v727 = vadd.f32 %v723, 1.0
    %v728 = vadd.f32 %v725, 1.0
    %v729 = vrcp.pop %v726
    %v730 = vmul.f32 1.0, %v729
    %v731 = vrcp.pop %v727
    %v732 = vmul.f32 1.0, %v731
    %v733 = vrcp.pop %v728
    %v734 = vmul.f32 1.0, %v733
    %v735 = vtanh.pop %v716
    %v736 = vmul.f32 %v732, 0.0
    %v737 = vmul.f32 %v730, %v735
    %v738 = vadd.f32 %v736, %v737
    %v739 = vtanh.pop %v738
    %v740 = vmul.f32 %v734, %v739
    %v741 = vpack.c.bf16 %v740, %v740
    %742 = vmatprep.subr.bf16.mxu0 %v568
    %743 = vmatpush1.bf16.msra.mxu0 %v567
    %744 = vmatprep.subr.bf16.mxu0 %v572
    %745 = vmatpush1.bf16.msra.mxu0 %v571
    %746 = vmatprep.subr.bf16.mxu0 %v576
    %747 = vmatpush1.bf16.msra.mxu0 %v575
    %748 = vmatprep.subr.bf16.mxu0 %v580
    %749 = vmatpush1.bf16.msra.mxu0 %v579
    %750 = vmatprep.subr.bf16.mxu0 %v584
    %751 = vmatpush1.bf16.msra.mxu0 %v583
    %752 = vmatprep.subr.bf16.mxu0 %v588
    %753 = vmatpush1.bf16.msra.mxu0 %v587
    %754 = vmatprep.subr.bf16.mxu0 %v592
    %755 = vmatpush1.bf16.msra.mxu0 %v591
    %756 = vmatprep.subr.bf16.mxu0 %v596
    %757 = vmatpush1.bf16.msra.mxu0 %v595
    %758 = vmatprep.subr.bf16.mxu0 0
    %759 = vmatpush1.bf16.msra.mxu0 0
    %760 = vmatprep.subr.bf16.mxu0 0
    %761 = vmatpush1.bf16.msra.mxu0 0
    %762 = vmatprep.subr.bf16.mxu0 0
    %763 = vmatpush1.bf16.msra.mxu0 0
    %764 = vmatprep.subr.bf16.mxu0 0
    %765 = vmatpush1.bf16.msra.mxu0 0
    %766 = vmatprep.subr.bf16.mxu0 0
    %767 = vmatpush1.bf16.msra.mxu0 0
    %768 = vmatprep.subr.bf16.mxu0 0
    %769 = vmatpush1.bf16.msra.mxu0 0
    %770 = vmatprep.subr.bf16.mxu0 0
    %771 = vmatpush1.bf16.msra.mxu0 0
    %772 = vmatprep.subr.bf16.mxu0 0
    %773 = vmatpush1.bf16.msra.mxu0 0
    %774 = vmatprep.mubr.bf16.mxu0 0
    %775 = vmatmul.mubr.bf16.gmra.mrb[0].mxu0 %v741
    %v776 = vpop.f32.mrb[0].mxu0
    %v777 = vadd.f32 0.0, %v776
    %v778 = vpop.f32.mrb[0].mxu0
    %v779 = vadd.f32 0.0, %v778
    %v780 = vpop.f32.mrb[0].mxu0
    %v781 = vpop.f32.mrb[0].mxu0
    %782 = vdwg.mxu0
    %783 = vmatprep.subr.bf16.mxu0 %v570
    %784 = vmatpush1.bf16.msra.mxu0 %v569
    %785 = vmatprep.subr.bf16.mxu0 %v574
    %786 = vmatpush1.bf16.msra.mxu0 %v573
    %787 = vmatprep.subr.bf16.mxu0 %v578
    %788 = vmatpush1.bf16.msra.mxu0 %v577
    %789 = vmatprep.subr.bf16.mxu0 %v582
    %790 = vmatpush1.bf16.msra.mxu0 %v581
    %791 = vmatprep.subr.bf16.mxu0 %v586
    %792 = vmatpush1.bf16.msra.mxu0 %v585
    %793 = vmatprep.subr.bf16.mxu0 %v590
    %794 = vmatpush1.bf16.msra.mxu0 %v589
    %795 = vmatprep.subr.bf16.mxu0 %v594
    %796 = vmatpush1.bf16.msra.mxu0 %v593
    %797 = vmatprep.subr.bf16.mxu0 %v598
    %798 = vmatpush1.bf16.msra.mxu0 %v597
    %799 = vmatprep.subr.bf16.mxu0 0
    %800 = vmatpush1.bf16.msra.mxu0 0
    %801 = vmatprep.subr.bf16.mxu0 0
    %802 = vmatpush1.bf16.msra.mxu0 0
    %803 = vmatprep.subr.bf16.mxu0 0
    %804 = vmatpush1.bf16.msra.mxu0 0
    %805 = vmatprep.subr.bf16.mxu0 0
    %806 = vmatpush1.bf16.msra.mxu0 0
    %807 = vmatprep.subr.bf16.mxu0 0
    %808 = vmatpush1.bf16.msra.mxu0 0
    %809 = vmatprep.subr.bf16.mxu0 0
    %810 = vmatpush1.bf16.msra.mxu0 0
    %811 = vmatprep.subr.bf16.mxu0 0
    %812 = vmatpush1.bf16.msra.mxu0 0
    %813 = vmatprep.subr.bf16.mxu0 0
    %814 = vmatpush1.bf16.msra.mxu0 0
    %815 = vmatprep.mubr.bf16.mxu0 0
    %816 = vmatmul.mubr.bf16.gmra.mrb[0].mxu0 %v741
    %v817 = vpop.f32.mrb[0].mxu0
    %v818 = vadd.f32 0.0, %v817
    %v819 = vpop.f32.mrb[0].mxu0
    %v820 = vadd.f32 0.0, %v819
    %v821 = vpop.f32.mrb[0].mxu0
    %v822 = vpop.f32.mrb[0].mxu0
    %823 = vdwg.mxu0
    %v824 = vadd.f32 %v332, %v777
    %v825 = vadd.f32 %v334, %v779
    %v826 = vadd.f32 %v405, %v818
    %v827 = vadd.f32 %v407, %v820
    %v828 = vxor.u32 %v824, 2147483648
    %v829 = vxor.u32 %v825, 2147483648
    %v830 = vxor.u32 %v826, 2147483648
    %v831 = vmul.f32 %v828, 1.442695
    %v832 = vpow.pop %v831
    %v833 = vmul.f32 %v829, 1.442695
    %v834 = vpow.pop %v833
    %v835 = vmul.f32 %v830, 1.442695
    %v836 = vpow.pop %v835
    %v837 = vadd.f32 %v832, 1.0
    %v838 = vadd.f32 %v834, 1.0
    %v839 = vadd.f32 %v836, 1.0
    %v840 = vrcp.pop %v837
    %v841 = vmul.f32 1.0, %v840
    %v842 = vrcp.pop %v838
    %v843 = vmul.f32 1.0, %v842
    %v844 = vrcp.pop %v839
    %v845 = vmul.f32 1.0, %v844
    %v846 = vtanh.pop %v827
    %v847 = vmul.f32 %v843, %v738
    %v848 = vmul.f32 %v841, %v846
    %v849 = vadd.f32 %v847, %v848
    %v850 = vtanh.pop %v849
    %v851 = vmul.f32 %v845, %v850
    %v852 = vpack.c.bf16 %v851, %v851
    %853 = vmatprep.subr.bf16.mxu0 %v568
    %854 = vmatpush1.bf16.msra.mxu0 %v567
    %855 = vmatprep.subr.bf16.mxu0 %v572
    %856 = vmatpush1.bf16.msra.mxu0 %v571
    %857 = vmatprep.subr.bf16.mxu0 %v576
    %858 = vmatpush1.bf16.msra.mxu0 %v575
    %859 = vmatprep.subr.bf16.mxu0 %v580
    %860 = vmatpush1.bf16.msra.mxu0 %v579
    %861 = vmatprep.subr.bf16.mxu0 %v584
    %862 = vmatpush1.bf16.msra.mxu0 %v583
    %863 = vmatprep.subr.bf16.mxu0 %v588
    %864 = vmatpush1.bf16.msra.mxu0 %v587
    %865 = vmatprep.subr.bf16.mxu0 %v592
    %866 = vmatpush1.bf16.msra.mxu0 %v591
    %867 = vmatprep.subr.bf16.mxu0 %v596
    %868 = vmatpush1.bf16.msra.mxu0 %v595
    %869 = vmatprep.subr.bf16.mxu0 0
    %870 = vmatpush1.bf16.msra.mxu0 0
    %871 = vmatprep.subr.bf16.mxu0 0
    %872 = vmatpush1.bf16.msra.mxu0 0
    %873 = vmatprep.subr.bf16.mxu0 0
    %874 = vmatpush1.bf16.msra.mxu0 0
    %875 = vmatprep.subr.bf16.mxu0 0
    %876 = vmatpush1.bf16.msra.mxu0 0
    %877 = vmatprep.subr.bf16.mxu0 0
    %878 = vmatpush1.bf16.msra.mxu0 0
    %879 = vmatprep.subr.bf16.mxu0 0
    %880 = vmatpush1.bf16.msra.mxu0 0
    %881 = vmatprep.subr.bf16.mxu0 0
    %882 = vmatpush1.bf16.msra.mxu0 0
    %883 = vmatprep.subr.bf16.mxu0 0
    %884 = vmatpush1.bf16.msra.mxu0 0
    %885 = vmatprep.mubr.bf16.mxu0 0
    %886 = vmatmul.mubr.bf16.gmra.mrb[0].mxu0 %v852
    %v887 = vpop.f32.mrb[0].mxu0
    %v888 = vadd.f32 0.0, %v887
    %v889 = vpop.f32.mrb[0].mxu0
    %v890 = vadd.f32 0.0, %v889
    %v891 = vpop.f32.mrb[0].mxu0
    %v892 = vpop.f32.mrb[0].mxu0
    %893 = vdwg.mxu0
    %894 = vmatprep.subr.bf16.mxu0 %v570
    %895 = vmatpush1.bf16.msra.mxu0 %v569
    %896 = vmatprep.subr.bf16.mxu0 %v574
    %897 = vmatpush1.bf16.msra.mxu0 %v573
    %898 = vmatprep.subr.bf16.mxu0 %v578
    %899 = vmatpush1.bf16.msra.mxu0 %v577
    %900 = vmatprep.subr.bf16.mxu0 %v582
    %901 = vmatpush1.bf16.msra.mxu0 %v581
    %902 = vmatprep.subr.bf16.mxu0 %v586
    %903 = vmatpush1.bf16.msra.mxu0 %v585
    %904 = vmatprep.subr.bf16.mxu0 %v590
    %905 = vmatpush1.bf16.msra.mxu0 %v589
    %906 = vmatprep.subr.bf16.mxu0 %v594
    %907 = vmatpush1.bf16.msra.mxu0 %v593
    %908 = vmatprep.subr.bf16.mxu0 %v598
    %909 = vmatpush1.bf16.msra.mxu0 %v597
    %910 = vmatprep.subr.bf16.mxu0 0
    %911 = vmatpush1.bf16.msra.mxu0 0
    %912 = vmatprep.subr.bf16.mxu0 0
    %913 = vmatpush1.bf16.msra.mxu0 0
    %914 = vmatprep.subr.bf16.mxu0 0
    %915 = vmatpush1.bf16.msra.mxu0 0
    %916 = vmatprep.subr.bf16.mxu0 0
    %917 = vmatpush1.bf16.msra.mxu0 0
    %918 = vmatprep.subr.bf16.mxu0 0
    %919 = vmatpush1.bf16.msra.mxu0 0
    %920 = vmatprep.subr.bf16.mxu0 0
    %921 = vmatpush1.bf16.msra.mxu0 0
    %922 = vmatprep.subr.bf16.mxu0 0
    %923 = vmatpush1.bf16.msra.mxu0 0
    %924 = vmatprep.subr.bf16.mxu0 0
    %925 = vmatpush1.bf16.msra.mxu0 0
    %926 = vmatprep.mubr.bf16.mxu0 0
    %927 = vmatmul.mubr.bf16.gmra.mrb[0].mxu0 %v852
    %v928 = vpop.f32.mrb[0].mxu0
    %v929 = vadd.f32 0.0, %v928
    %v930 = vpop.f32.mrb[0].mxu0
    %v931 = vadd.f32 0.0, %v930
    %v932 = vpop.f32.mrb[0].mxu0
    %v933 = vpop.f32.mrb[0].mxu0
    %934 = vdwg.mxu0
    %v935 = vadd.f32 %v338, %v888
    %v936 = vadd.f32 %v340, %v890
    %v937 = vadd.f32 %v411, %v929
    %v938 = vadd.f32 %v413, %v931
    %v939 = vxor.u32 %v935, 2147483648
    %v940 = vxor.u32 %v936, 2147483648
    %v941 = vxor.u32 %v937, 2147483648
    %v942 = vmul.f32 %v939, 1.442695
    %v943 = vpow.pop %v942
    %v944 = vmul.f32 %v940, 1.442695
    %v945 = vpow.pop %v944
    %v946 = vmul.f32 %v941, 1.442695
    %v947 = vpow.pop %v946
    %v948 = vadd.f32 %v943, 1.0
    %v949 = vadd.f32 %v945, 1.0
    %v950 = vadd.f32 %v947, 1.0
    %v951 = vrcp.pop %v948
    %v952 = vmul.f32 1.0, %v951
    %v953 = vrcp.pop %v949
    %v954 = vmul.f32 1.0, %v953
    %v955 = vrcp.pop %v950
    %v956 = vmul.f32 1.0, %v955
    %v957 = vtanh.pop %v938
    %v958 = vmul.f32 %v954, %v849
    %v959 = vmul.f32 %v952, %v957
    %v960 = vadd.f32 %v958, %v959
    %v961 = vtanh.pop %v960
    %v962 = vmul.f32 %v956, %v961
    %v963 = vpack.c.bf16 %v962, %v962
    %964 = vmatprep.subr.bf16.mxu0 %v568
    %965 = vmatpush1.bf16.msra.mxu0 %v567
    %966 = vmatprep.subr.bf16.mxu0 %v572
    %967 = vmatpush1.bf16.msra.mxu0 %v571
    %968 = vmatprep.subr.bf16.mxu0 %v576
    %969 = vmatpush1.bf16.msra.mxu0 %v575
    %970 = vmatprep.subr.bf16.mxu0 %v580
    %971 = vmatpush1.bf16.msra.mxu0 %v579
    %972 = vmatprep.subr.bf16.mxu0 %v584
    %973 = vmatpush1.bf16.msra.mxu0 %v583
    %974 = vmatprep.subr.bf16.mxu0 %v588
    %975 = vmatpush1.bf16.msra.mxu0 %v587
    %976 = vmatprep.subr.bf16.mxu0 %v592
    %977 = vmatpush1.bf16.msra.mxu0 %v591
    %978 = vmatprep.subr.bf16.mxu0 %v596
    %979 = vmatpush1.bf16.msra.mxu0 %v595
    %980 = vmatprep.subr.bf16.mxu0 0
    %981 = vmatpush1.bf16.msra.mxu0 0
    %982 = vmatprep.subr.bf16.mxu0 0
    %983 = vmatpush1.bf16.msra.mxu0 0
    %984 = vmatprep.subr.bf16.mxu0 0
    %985 = vmatpush1.bf16.msra.mxu0 0
    %986 = vmatprep.subr.bf16.mxu0 0
    %987 = vmatpush1.bf16.msra.mxu0 0
    %988 = vmatprep.subr.bf16.mxu0 0
    %989 = vmatpush1.bf16.msra.mxu0 0
    %990 = vmatprep.subr.bf16.mxu0 0
    %991 = vmatpush1.bf16.msra.mxu0 0
    %992 = vmatprep.subr.bf16.mxu0 0
    %993 = vmatpush1.bf16.msra.mxu0 0
    %994 = vmatprep.subr.bf16.mxu0 0
    %995 = vmatpush1.bf16.msra.mxu0 0
    %996 = vmatprep.mubr.bf16.mxu0 0
    %997 = vmatmul.mubr.bf16.gmra.mrb[0].mxu0 %v963
    %v998 = vpop.f32.mrb[0].mxu0
    %v999 = vadd.f32 0.0, %v998
    %v1000 = vpop.f32.mrb[0].mxu0
    %v1001 = vadd.f32 0.0, %v1000
    %v1002 = vpop.f32.mrb[0].mxu0
    %v1003 = vpop.f32.mrb[0].mxu0
    %1004 = vdwg.mxu0
    %1005 = vmatprep.subr.bf16.mxu0 %v570
    %1006 = vmatpush1.bf16.msra.mxu0 %v569
    %1007 = vmatprep.subr.bf16.mxu0 %v574
    %1008 = vmatpush1.bf16.msra.mxu0 %v573
    %1009 = vmatprep.subr.bf16.mxu0 %v578
    %1010 = vmatpush1.bf16.msra.mxu0 %v577
    %1011 = vmatprep.subr.bf16.mxu0 %v582
    %1012 = vmatpush1.bf16.msra.mxu0 %v581
    %1013 = vmatprep.subr.bf16.mxu0 %v586
    %1014 = vmatpush1.bf16.msra.mxu0 %v585
    %1015 = vmatprep.subr.bf16.mxu0 %v590
    %1016 = vmatpush1.bf16.msra.mxu0 %v589
    %1017 = vmatprep.subr.bf16.mxu0 %v594
    %1018 = vmatpush1.bf16.msra.mxu0 %v593
    %1019 = vmatprep.subr.bf16.mxu0 %v598
    %1020 = vmatpush1.bf16.msra.mxu0 %v597
    %1021 = vmatprep.subr.bf16.mxu0 0
    %1022 = vmatpush1.bf16.msra.mxu0 0
    %1023 = vmatprep.subr.bf16.mxu0 0
    %1024 = vmatpush1.bf16.msra.mxu0 0
    %1025 = vmatprep.subr.bf16.mxu0 0
    %1026 = vmatpush1.bf16.msra.mxu0 0
    %1027 = vmatprep.subr.bf16.mxu0 0
    %1028 = vmatpush1.bf16.msra.mxu0 0
    %1029 = vmatprep.subr.bf16.mxu0 0
    %1030 = vmatpush1.bf16.msra.mxu0 0
    %1031 = vmatprep.subr.bf16.mxu0 0
    %1032 = vmatpush1.bf16.msra.mxu0 0
    %1033 = vmatprep.subr.bf16.mxu0 0
    %1034 = vmatpush1.bf16.msra.mxu0 0
    %1035 = vmatprep.subr.bf16.mxu0 0
    %1036 = vmatpush1.bf16.msra.mxu0 0
    %1037 = vmatprep.mubr.bf16.mxu0 0
    %1038 = vmatmul.mubr.bf16.gmra.mrb[0].mxu0 %v963
    %v1039 = vpop.f32.mrb[0].mxu0
    %v1040 = vadd.f32 0.0, %v1039
    %v1041 = vpop.f32.mrb[0].mxu0
    %v1042 = vadd.f32 0.0, %v1041
    %v1043 = vpop.f32.mrb[0].mxu0
    %v1044 = vpop.f32.mrb[0].mxu0
    %1045 = vdwg.mxu0
    %v1046 = vadd.f32 %v342, %v999
    %v1047 = vadd.f32 %v344, %v1001
    %v1048 = vadd.f32 %v415, %v1040
    %v1049 = vadd.f32 %v417, %v1042
    %v1050 = vxor.u32 %v1046, 2147483648
    %v1051 = vxor.u32 %v1047, 2147483648
    %v1052 = vxor.u32 %v1048, 2147483648
    %v1053 = vmul.f32 %v1050, 1.442695
    %v1054 = vpow.pop %v1053
    %v1055 = vmul.f32 %v1051, 1.442695
    %v1056 = vpow.pop %v1055
    %v1057 = vmul.f32 %v1052, 1.442695
    %v1058 = vpow.pop %v1057
    %v1059 = vadd.f32 %v1054, 1.0
    %v1060 = vadd.f32 %v1056, 1.0
    %v1061 = vadd.f32 %v1058, 1.0
    %v1062 = vrcp.pop %v1059
    %v1063 = vmul.f32 1.0, %v1062
    %v1064 = vrcp.pop %v1060
    %v1065 = vmul.f32 1.0, %v1064
    %v1066 = vrcp.pop %v1061
    %v1067 = vmul.f32 1.0, %v1066
    %v1068 = vtanh.pop %v1049
    %v1069 = vmul.f32 %v1065, %v960
    %v1070 = vmul.f32 %v1063, %v1068
    %v1071 = vadd.f32 %v1069, %v1070
    %v1072 = vtanh.pop %v1071
    %v1073 = vmul.f32 %v1067, %v1072
    %v1074 = vpack.c.bf16 %v1073, %v1073
    %1075 = vmatprep.subr.bf16.mxu0 %v568
    %1076 = vmatpush1.bf16.msra.mxu0 %v567
    %1077 = vmatprep.subr.bf16.mxu0 %v572
    %1078 = vmatpush1.bf16.msra.mxu0 %v571
    %1079 = vmatprep.subr.bf16.mxu0 %v576
    %1080 = vmatpush1.bf16.msra.mxu0 %v575
    %1081 = vmatprep.subr.bf16.mxu0 %v580
    %1082 = vmatpush1.bf16.msra.mxu0 %v579
    %1083 = vmatprep.subr.bf16.mxu0 %v584
    %1084 = vmatpush1.bf16.msra.mxu0 %v583
    %1085 = vmatprep.subr.bf16.mxu0 %v588
    %1086 = vmatpush1.bf16.msra.mxu0 %v587
    %1087 = vmatprep.subr.bf16.mxu0 %v592
    %1088 = vmatpush1.bf16.msra.mxu0 %v591
    %1089 = vmatprep.subr.bf16.mxu0 %v596
    %1090 = vmatpush1.bf16.msra.mxu0 %v595
    %1091 = vmatprep.subr.bf16.mxu0 0
    %1092 = vmatpush1.bf16.msra.mxu0 0
    %1093 = vmatprep.subr.bf16.mxu0 0
    %1094 = vmatpush1.bf16.msra.mxu0 0
    %1095 = vmatprep.subr.bf16.mxu0 0
    %1096 = vmatpush1.bf16.msra.mxu0 0
    %1097 = vmatprep.subr.bf16.mxu0 0
    %1098 = vmatpush1.bf16.msra.mxu0 0
    %1099 = vmatprep.subr.bf16.mxu0 0
    %1100 = vmatpush1.bf16.msra.mxu0 0
    %1101 = vmatprep.subr.bf16.mxu0 0
    %1102 = vmatpush1.bf16.msra.mxu0 0
    %1103 = vmatprep.subr.bf16.mxu0 0
    %1104 = vmatpush1.bf16.msra.mxu0 0
    %1105 = vmatprep.subr.bf16.mxu0 0
    %1106 = vmatpush1.bf16.msra.mxu0 0
    %1107 = vmatprep.mubr.bf16.mxu0 0
    %1108 = vmatmul.mubr.bf16.gmra.mrb[0].mxu0 %v1074
    %v1109 = vpop.f32.mrb[0].mxu0
    %v1110 = vadd.f32 0.0, %v1109
    %v1111 = vpop.f32.mrb[0].mxu0
    %v1112 = vadd.f32 0.0, %v1111
    %v1113 = vpop.f32.mrb[0].mxu0
    %v1114 = vpop.f32.mrb[0].mxu0
    %1115 = vdwg.mxu0
    %1116 = vmatprep.subr.bf16.mxu0 %v570
    %1117 = vmatpush1.bf16.msra.mxu0 %v569
    %1118 = vmatprep.subr.bf16.mxu0 %v574
    %1119 = vmatpush1.bf16.msra.mxu0 %v573
    %1120 = vmatprep.subr.bf16.mxu0 %v578
    %1121 = vmatpush1.bf16.msra.mxu0 %v577
    %1122 = vmatprep.subr.bf16.mxu0 %v582
    %1123 = vmatpush1.bf16.msra.mxu0 %v581
    %1124 = vmatprep.subr.bf16.mxu0 %v586
    %1125 = vmatpush1.bf16.msra.mxu0 %v585
    %1126 = vmatprep.subr.bf16.mxu0 %v590
    %1127 = vmatpush1.bf16.msra.mxu0 %v589
    %1128 = vmatprep.subr.bf16.mxu0 %v594
    %1129 = vmatpush1.bf16.msra.mxu0 %v593
    %1130 = vmatprep.subr.bf16.mxu0 %v598
    %1131 = vmatpush1.bf16.msra.mxu0 %v597
    %1132 = vmatprep.subr.bf16.mxu0 0
    %1133 = vmatpush1.bf16.msra.mxu0 0
    %1134 = vmatprep.subr.bf16.mxu0 0
    %1135 = vmatpush1.bf16.msra.mxu0 0
    %1136 = vmatprep.subr.bf16.mxu0 0
    %1137 = vmatpush1.bf16.msra.mxu0 0
    %1138 = vmatprep.subr.bf16.mxu0 0
    %1139 = vmatpush1.bf16.msra.mxu0 0
    %1140 = vmatprep.subr.bf16.mxu0 0
    %1141 = vmatpush1.bf16.msra.mxu0 0
    %1142 = vmatprep.subr.bf16.mxu0 0
    %1143 = vmatpush1.bf16.msra.mxu0 0
    %1144 = vmatprep.subr.bf16.mxu0 0
    %1145 = vmatpush1.bf16.msra.mxu0 0
    %1146 = vmatprep.subr.bf16.mxu0 0
    %1147 = vmatpush1.bf16.msra.mxu0 0
    %1148 = vmatprep.mubr.bf16.mxu0 0
    %1149 = vmatmul.mubr.bf16.gmra.mrb[0].mxu0 %v1074
    %v1150 = vpop.f32.mrb[0].mxu0
    %v1151 = vadd.f32 0.0, %v1150
    %v1152 = vpop.f32.mrb[0].mxu0
    %v1153 = vadd.f32 0.0, %v1152
    %v1154 = vpop.f32.mrb[0].mxu0
    %v1155 = vpop.f32.mrb[0].mxu0
    %1156 = vdwg.mxu0
    %v1157 = vadd.f32 %v348, %v1110
    %v1158 = vadd.f32 %v350, %v1112
    %v1159 = vadd.f32 %v421, %v1151
    %v1160 = vadd.f32 %v423, %v1153
    %v1161 = vxor.u32 %v1157, 2147483648
    %v1162 = vxor.u32 %v1158, 2147483648
    %v1163 = vxor.u32 %v1159, 2147483648
    %v1164 = vmul.f32 %v1161, 1.442695
    %v1165 = vpow.pop %v1164
    %v1166 = vmul.f32 %v1162, 1.442695
    %v1167 = vpow.pop %v1166
    %v1168 = vmul.f32 %v1163, 1.442695
    %v1169 = vpow.pop %v1168
    %v1170 = vadd.f32 %v1165, 1.0
    %v1171 = vadd.f32 %v1167, 1.0
    %v1172 = vadd.f32 %v1169, 1.0
    %v1173 = vrcp.pop %v1170
    %v1174 = vmul.f32 1.0, %v1173
    %v1175 = vrcp.pop %v1171
    %v1176 = vmul.f32 1.0, %v1175
    %v1177 = vrcp.pop %v1172
    %v1178 = vmul.f32 1.0, %v1177
    %v1179 = vtanh.pop %v1160
    %v1180 = vmul.f32 %v1176, %v1071
    %v1181 = vmul.f32 %v1174, %v1179
    %v1182 = vadd.f32 %v1180, %v1181
    %v1183 = vtanh.pop %v1182
    %v1184 = vmul.f32 %v1178, %v1183
    %v1185 = vpack.c.bf16 %v1184, %v1184
    %1186 = vmatprep.subr.bf16.mxu0 %v568
    %1187 = vmatpush1.bf16.msra.mxu0 %v567
    %1188 = vmatprep.subr.bf16.mxu0 %v572
    %1189 = vmatpush1.bf16.msra.mxu0 %v571
    %1190 = vmatprep.subr.bf16.mxu0 %v576
    %1191 = vmatpush1.bf16.msra.mxu0 %v575
    %1192 = vmatprep.subr.bf16.mxu0 %v580
    %1193 = vmatpush1.bf16.msra.mxu0 %v579
    %1194 = vmatprep.subr.bf16.mxu0 %v584
    %1195 = vmatpush1.bf16.msra.mxu0 %v583
    %1196 = vmatprep.subr.bf16.mxu0 %v588
    %1197 = vmatpush1.bf16.msra.mxu0 %v587
    %1198 = vmatprep.subr.bf16.mxu0 %v592
    %1199 = vmatpush1.bf16.msra.mxu0 %v591
    %1200 = vmatprep.subr.bf16.mxu0 %v596
    %1201 = vmatpush1.bf16.msra.mxu0 %v595
    %1202 = vmatprep.subr.bf16.mxu0 0
    %1203 = vmatpush1.bf16.msra.mxu0 0
    %1204 = vmatprep.subr.bf16.mxu0 0
    %1205 = vmatpush1.bf16.msra.mxu0 0
    %1206 = vmatprep.subr.bf16.mxu0 0
    %1207 = vmatpush1.bf16.msra.mxu0 0
    %1208 = vmatprep.subr.bf16.mxu0 0
    %1209 = vmatpush1.bf16.msra.mxu0 0
    %1210 = vmatprep.subr.bf16.mxu0 0
    %1211 = vmatpush1.bf16.msra.mxu0 0
    %1212 = vmatprep.subr.bf16.mxu0 0
    %1213 = vmatpush1.bf16.msra.mxu0 0
    %1214 = vmatprep.subr.bf16.mxu0 0
    %1215 = vmatpush1.bf16.msra.mxu0 0
    %1216 = vmatprep.subr.bf16.mxu0 0
    %1217 = vmatpush1.bf16.msra.mxu0 0
    %1218 = vmatprep.mubr.bf16.mxu0 0
    %1219 = vmatmul.mubr.bf16.gmra.mrb[0].mxu0 %v1185
    %v1220 = vpop.f32.mrb[0].mxu0
    %v1221 = vadd.f32 0.0, %v1220
    %v1222 = vpop.f32.mrb[0].mxu0
    %v1223 = vadd.f32 0.0, %v1222
    %v1224 = vpop.f32.mrb[0].mxu0
    %v1225 = vpop.f32.mrb[0].mxu0
    %1226 = vdwg.mxu0
    %1227 = vmatprep.subr.bf16.mxu0 %v570
    %1228 = vmatpush1.bf16.msra.mxu0 %v569
    %1229 = vmatprep.subr.bf16.mxu0 %v574
    %1230 = vmatpush1.bf16.msra.mxu0 %v573
    %1231 = vmatprep.subr.bf16.mxu0 %v578
    %1232 = vmatpush1.bf16.msra.mxu0 %v577
    %1233 = vmatprep.subr.bf16.mxu0 %v582
    %1234 = vmatpush1.bf16.msra.mxu0 %v581
    %1235 = vmatprep.subr.bf16.mxu0 %v586
    %1236 = vmatpush1.bf16.msra.mxu0 %v585
    %1237 = vmatprep.subr.bf16.mxu0 %v590
    %1238 = vmatpush1.bf16.msra.mxu0 %v589
    %1239 = vmatprep.subr.bf16.mxu0 %v594
    %1240 = vmatpush1.bf16.msra.mxu0 %v593
    %1241 = vmatprep.subr.bf16.mxu0 %v598
    %1242 = vmatpush1.bf16.msra.mxu0 %v597
    %1243 = vmatprep.subr.bf16.mxu0 0
    %1244 = vmatpush1.bf16.msra.mxu0 0
    %1245 = vmatprep.subr.bf16.mxu0 0
    %1246 = vmatpush1.bf16.msra.mxu0 0
    %1247 = vmatprep.subr.bf16.mxu0 0
    %1248 = vmatpush1.bf16.msra.mxu0 0
    %1249 = vmatprep.subr.bf16.mxu0 0
    %1250 = vmatpush1.bf16.msra.mxu0 0
    %1251 = vmatprep.subr.bf16.mxu0 0
    %1252 = vmatpush1.bf16.msra.mxu0 0
    %1253 = vmatprep.subr.bf16.mxu0 0
    %1254 = vmatpush1.bf16.msra.mxu0 0
    %1255 = vmatprep.subr.bf16.mxu0 0
    %1256 = vmatpush1.bf16.msra.mxu0 0
    %1257 = vmatprep.subr.bf16.mxu0 0
    %1258 = vmatpush1.bf16.msra.mxu0 0
    %1259 = vmatprep.mubr.bf16.mxu0 0
    %1260 = vmatmul.mubr.bf16.gmra.mrb[0].mxu0 %v1185
    %v1261 = vpop.f32.mrb[0].mxu0
    %v1262 = vadd.f32 0.0, %v1261
    %v1263 = vpop.f32.mrb[0].mxu0
    %v1264 = vadd.f32 0.0, %v1263
    %v1265 = vpop.f32.mrb[0].mxu0
    %v1266 = vpop.f32.mrb[0].mxu0
    %1267 = vdwg.mxu0
    %v1268 = vadd.f32 %v352, %v1221
    %v1269 = vadd.f32 %v354, %v1223
    %v1270 = vadd.f32 %v425, %v1262
    %v1271 = vadd.f32 %v427, %v1264
    %v1272 = vxor.u32 %v1268, 2147483648
    %v1273 = vxor.u32 %v1269, 2147483648
    %v1274 = vxor.u32 %v1270, 2147483648
    %v1275 = vmul.f32 %v1272, 1.442695
    %v1276 = vpow.pop %v1275
    %v1277 = vmul.f32 %v1273, 1.442695
    %v1278 = vpow.pop %v1277
    %v1279 = vmul.f32 %v1274, 1.442695
    %v1280 = vpow.pop %v1279
    %v1281 = vadd.f32 %v1276, 1.0
    %v1282 = vadd.f32 %v1278, 1.0
    %v1283 = vadd.f32 %v1280, 1.0
    %v1284 = vrcp.pop %v1281
    %v1285 = vmul.f32 1.0, %v1284
    %v1286 = vrcp.pop %v1282
    %v1287 = vmul.f32 1.0, %v1286
    %v1288 = vrcp.pop %v1283
    %v1289 = vmul.f32 1.0, %v1288
    %v1290 = vtanh.pop %v1271
    %v1291 = vmul.f32 %v1287, %v1182
    %v1292 = vmul.f32 %v1285, %v1290
    %v1293 = vadd.f32 %v1291, %v1292
    %v1294 = vtanh.pop %v1293
    %v1295 = vmul.f32 %v1289, %v1294
    %v1296 = vpack.c.bf16 %v1295, %v1295
    %1297 = vmatprep.subr.bf16.mxu0 %v568
    %1298 = vmatpush1.bf16.msra.mxu0 %v567
    %1299 = vmatprep.subr.bf16.mxu0 %v572
    %1300 = vmatpush1.bf16.msra.mxu0 %v571
    %1301 = vmatprep.subr.bf16.mxu0 %v576
    %1302 = vmatpush1.bf16.msra.mxu0 %v575
    %1303 = vmatprep.subr.bf16.mxu0 %v580
    %1304 = vmatpush1.bf16.msra.mxu0 %v579
    %1305 = vmatprep.subr.bf16.mxu0 %v584
    %1306 = vmatpush1.bf16.msra.mxu0 %v583
    %1307 = vmatprep.subr.bf16.mxu0 %v588
    %1308 = vmatpush1.bf16.msra.mxu0 %v587
    %1309 = vmatprep.subr.bf16.mxu0 %v592
    %1310 = vmatpush1.bf16.msra.mxu0 %v591
    %1311 = vmatprep.subr.bf16.mxu0 %v596
    %1312 = vmatpush1.bf16.msra.mxu0 %v595
    %1313 = vmatprep.subr.bf16.mxu0 0
    %1314 = vmatpush1.bf16.msra.mxu0 0
    %1315 = vmatprep.subr.bf16.mxu0 0
    %1316 = vmatpush1.bf16.msra.mxu0 0
    %1317 = vmatprep.subr.bf16.mxu0 0
    %1318 = vmatpush1.bf16.msra.mxu0 0
    %1319 = vmatprep.subr.bf16.mxu0 0
    %1320 = vmatpush1.bf16.msra.mxu0 0
    %1321 = vmatprep.subr.bf16.mxu0 0
    %1322 = vmatpush1.bf16.msra.mxu0 0
    %1323 = vmatprep.subr.bf16.mxu0 0
    %1324 = vmatpush1.bf16.msra.mxu0 0
    %1325 = vmatprep.subr.bf16.mxu0 0
    %1326 = vmatpush1.bf16.msra.mxu0 0
    %1327 = vmatprep.subr.bf16.mxu0 0
    %1328 = vmatpush1.bf16.msra.mxu0 0
    %1329 = vmatprep.mubr.bf16.mxu0 0
    %1330 = vmatmul.mubr.bf16.gmra.mrb[0].mxu0 %v1296
    %v1331 = vpop.f32.mrb[0].mxu0
    %v1332 = vadd.f32 0.0, %v1331
    %v1333 = vpop.f32.mrb[0].mxu0
    %v1334 = vadd.f32 0.0, %v1333
    %v1335 = vpop.f32.mrb[0].mxu0
    %v1336 = vpop.f32.mrb[0].mxu0
    %1337 = vdwg.mxu0
    %1338 = vmatprep.subr.bf16.mxu0 %v570
    %1339 = vmatpush1.bf16.msra.mxu0 %v569
    %1340 = vmatprep.subr.bf16.mxu0 %v574
    %1341 = vmatpush1.bf16.msra.mxu0 %v573
    %1342 = vmatprep.subr.bf16.mxu0 %v578
    %1343 = vmatpush1.bf16.msra.mxu0 %v577
    %1344 = vmatprep.subr.bf16.mxu0 %v582
    %1345 = vmatpush1.bf16.msra.mxu0 %v581
    %1346 = vmatprep.subr.bf16.mxu0 %v586
    %1347 = vmatpush1.bf16.msra.mxu0 %v585
    %1348 = vmatprep.subr.bf16.mxu0 %v590
    %1349 = vmatpush1.bf16.msra.mxu0 %v589
    %1350 = vmatprep.subr.bf16.mxu0 %v594
    %1351 = vmatpush1.bf16.msra.mxu0 %v593
    %1352 = vmatprep.subr.bf16.mxu0 %v598
    %1353 = vmatpush1.bf16.msra.mxu0 %v597
    %1354 = vmatprep.subr.bf16.mxu0 0
    %1355 = vmatpush1.bf16.msra.mxu0 0
    %1356 = vmatprep.subr.bf16.mxu0 0
    %1357 = vmatpush1.bf16.msra.mxu0 0
    %1358 = vmatprep.subr.bf16.mxu0 0
    %1359 = vmatpush1.bf16.msra.mxu0 0
    %1360 = vmatprep.subr.bf16.mxu0 0
    %1361 = vmatpush1.bf16.msra.mxu0 0
    %1362 = vmatprep.subr.bf16.mxu0 0
    %1363 = vmatpush1.bf16.msra.mxu0 0
    %1364 = vmatprep.subr.bf16.mxu0 0
    %1365 = vmatpush1.bf16.msra.mxu0 0
    %1366 = vmatprep.subr.bf16.mxu0 0
    %1367 = vmatpush1.bf16.msra.mxu0 0
    %1368 = vmatprep.subr.bf16.mxu0 0
    %1369 = vmatpush1.bf16.msra.mxu0 0
    %1370 = vmatprep.mubr.bf16.mxu0 0
    %1371 = vmatmul.mubr.bf16.gmra.mrb[0].mxu0 %v1296
    %v1372 = vpop.f32.mrb[0].mxu0
    %v1373 = vadd.f32 0.0, %v1372
    %v1374 = vpop.f32.mrb[0].mxu0
    %v1375 = vadd.f32 0.0, %v1374
    %v1376 = vpop.f32.mrb[0].mxu0
    %v1377 = vpop.f32.mrb[0].mxu0
    %1378 = vdwg.mxu0
    %v1379 = vadd.f32 %v358, %v1332
    %v1380 = vadd.f32 %v360, %v1334
    %v1381 = vadd.f32 %v431, %v1373
    %v1382 = vadd.f32 %v433, %v1375
    %v1383 = vxor.u32 %v1379, 2147483648
    %v1384 = vxor.u32 %v1380, 2147483648
    %v1385 = vxor.u32 %v1381, 2147483648
    %v1386 = vmul.f32 %v1383, 1.442695
    %v1387 = vpow.pop %v1386
    %v1388 = vmul.f32 %v1384, 1.442695
    %v1389 = vpow.pop %v1388
    %v1390 = vmul.f32 %v1385, 1.442695
    %v1391 = vpow.pop %v1390
    %v1392 = vadd.f32 %v1387, 1.0
    %v1393 = vadd.f32 %v1389, 1.0
    %v1394 = vadd.f32 %v1391, 1.0
    %v1395 = vrcp.pop %v1392
    %v1396 = vmul.f32 1.0, %v1395
    %v1397 = vrcp.pop %v1393
    %v1398 = vmul.f32 1.0, %v1397
    %v1399 = vrcp.pop %v1394
    %v1400 = vmul.f32 1.0, %v1399
    %v1401 = vtanh.pop %v1382
    %v1402 = vmul.f32 %v1398, %v1293
    %v1403 = vmul.f32 %v1396, %v1401
    %v1404 = vadd.f32 %v1402, %v1403
    %v1405 = vtanh.pop %v1404
    %v1406 = vmul.f32 %v1400, %v1405
    %v1407 = vpack.c.bf16 %v1406, %v1406
    %1408 = vmatprep.subr.bf16.mxu0 %v568
    %1409 = vmatpush1.bf16.msra.mxu0 %v567
    %1410 = vmatprep.subr.bf16.mxu0 %v572
    %1411 = vmatpush1.bf16.msra.mxu0 %v571
    %1412 = vmatprep.subr.bf16.mxu0 %v576
    %1413 = vmatpush1.bf16.msra.mxu0 %v575
    %1414 = vmatprep.subr.bf16.mxu0 %v580
    %1415 = vmatpush1.bf16.msra.mxu0 %v579
    %1416 = vmatprep.subr.bf16.mxu0 %v584
    %1417 = vmatpush1.bf16.msra.mxu0 %v583
    %1418 = vmatprep.subr.bf16.mxu0 %v588
    %1419 = vmatpush1.bf16.msra.mxu0 %v587
    %1420 = vmatprep.subr.bf16.mxu0 %v592
    %1421 = vmatpush1.bf16.msra.mxu0 %v591
    %1422 = vmatprep.subr.bf16.mxu0 %v596
    %1423 = vmatpush1.bf16.msra.mxu0 %v595
    %1424 = vmatprep.subr.bf16.mxu0 0
    %1425 = vmatpush1.bf16.msra.mxu0 0
    %1426 = vmatprep.subr.bf16.mxu0 0
    %1427 = vmatpush1.bf16.msra.mxu0 0
    %1428 = vmatprep.subr.bf16.mxu0 0
    %1429 = vmatpush1.bf16.msra.mxu0 0
    %1430 = vmatprep.subr.bf16.mxu0 0
    %1431 = vmatpush1.bf16.msra.mxu0 0
    %1432 = vmatprep.subr.bf16.mxu0 0
    %1433 = vmatpush1.bf16.msra.mxu0 0
    %1434 = vmatprep.subr.bf16.mxu0 0
    %1435 = vmatpush1.bf16.msra.mxu0 0
    %1436 = vmatprep.subr.bf16.mxu0 0
    %1437 = vmatpush1.bf16.msra.mxu0 0
    %1438 = vmatprep.subr.bf16.mxu0 0
    %1439 = vmatpush1.bf16.msra.mxu0 0
    %1440 = vmatprep.mubr.bf16.mxu0 0
    %1441 = vmatmul.mubr.bf16.gmra.mrb[0].mxu0 %v1407
    %v1442 = vpop.f32.mrb[0].mxu0
    %v1443 = vadd.f32 0.0, %v1442
    %v1444 = vpop.f32.mrb[0].mxu0
    %v1445 = vadd.f32 0.0, %v1444
    %v1446 = vpop.f32.mrb[0].mxu0
    %v1447 = vpop.f32.mrb[0].mxu0
    %1448 = vdwg.mxu0
    %1449 = vmatprep.subr.bf16.mxu0 %v570
    %1450 = vmatpush1.bf16.msra.mxu0 %v569
    %1451 = vmatprep.subr.bf16.mxu0 %v574
    %1452 = vmatpush1.bf16.msra.mxu0 %v573
    %1453 = vmatprep.subr.bf16.mxu0 %v578
    %1454 = vmatpush1.bf16.msra.mxu0 %v577
    %1455 = vmatprep.subr.bf16.mxu0 %v582
    %1456 = vmatpush1.bf16.msra.mxu0 %v581
    %1457 = vmatprep.subr.bf16.mxu0 %v586
    %1458 = vmatpush1.bf16.msra.mxu0 %v585
    %1459 = vmatprep.subr.bf16.mxu0 %v590
    %1460 = vmatpush1.bf16.msra.mxu0 %v589
    %1461 = vmatprep.subr.bf16.mxu0 %v594
    %1462 = vmatpush1.bf16.msra.mxu0 %v593
    %1463 = vmatprep.subr.bf16.mxu0 %v598
    %1464 = vmatpush1.bf16.msra.mxu0 %v597
    %1465 = vmatprep.subr.bf16.mxu0 0
    %1466 = vmatpush1.bf16.msra.mxu0 0
    %1467 = vmatprep.subr.bf16.mxu0 0
    %1468 = vmatpush1.bf16.msra.mxu0 0
    %1469 = vmatprep.subr.bf16.mxu0 0
    %1470 = vmatpush1.bf16.msra.mxu0 0
    %1471 = vmatprep.subr.bf16.mxu0 0
    %1472 = vmatpush1.bf16.msra.mxu0 0
    %1473 = vmatprep.subr.bf16.mxu0 0
    %1474 = vmatpush1.bf16.msra.mxu0 0
    %1475 = vmatprep.subr.bf16.mxu0 0
    %1476 = vmatpush1.bf16.msra.mxu0 0
    %1477 = vmatprep.subr.bf16.mxu0 0
    %1478 = vmatpush1.bf16.msra.mxu0 0
    %1479 = vmatprep.subr.bf16.mxu0 0
    %1480 = vmatpush1.bf16.msra.mxu0 0
    %1481 = vmatprep.mubr.bf16.mxu0 0
    %1482 = vmatmul.mubr.bf16.gmra.mrb[0].mxu0 %v1407
    %v1483 = vpop.f32.mrb[0].mxu0
    %v1484 = vadd.f32 0.0, %v1483
    %v1485 = vpop.f32.mrb[0].mxu0
    %v1486 = vadd.f32 0.0, %v1485
    %v1487 = vpop.f32.mrb[0].mxu0
    %v1488 = vpop.f32.mrb[0].mxu0
    %1489 = vdwg.mxu0
    %v1490 = vadd.f32 %v362, %v1443
    %v1491 = vadd.f32 %v364, %v1445
    %v1492 = vadd.f32 %v435, %v1484
    %v1493 = vadd.f32 %v437, %v1486
    %v1494 = vxor.u32 %v1490, 2147483648
    %v1495 = vxor.u32 %v1491, 2147483648
    %v1496 = vxor.u32 %v1492, 2147483648
    %v1497 = vmul.f32 %v1494, 1.442695
    %v1498 = vpow.pop %v1497
    %v1499 = vmul.f32 %v1495, 1.442695
    %v1500 = vpow.pop %v1499
    %v1501 = vmul.f32 %v1496, 1.442695
    %v1502 = vpow.pop %v1501
    %v1503 = vadd.f32 %v1498, 1.0
    %v1504 = vadd.f32 %v1500, 1.0
    %v1505 = vadd.f32 %v1502, 1.0
    %v1506 = vrcp.pop %v1503
    %v1507 = vmul.f32 1.0, %v1506
    %v1508 = vrcp.pop %v1504
    %v1509 = vmul.f32 1.0, %v1508
    %v1510 = vrcp.pop %v1505
    %v1511 = vmul.f32 1.0, %v1510
    %v1512 = vtanh.pop %v1493
    %v1513 = vmul.f32 %v1509, %v1404
    %v1514 = vmul.f32 %v1507, %v1512
    %v1515 = vadd.f32 %v1513, %v1514
    %v1516 = vtanh.pop %v1515
    %v1517 = vmul.f32 %v1511, %v1516
    %v1518 = vpack.c.bf16 %v1517, %v1517
    %v1519 = vld [vmem:[%s4] sm:$0xf]
    %v1520 = vld [vmem:[%s4 + $0x4] sm:$0xf]
    %v1521 = vld [vmem:[%s4 + $0x8] sm:$0xf]
    %v1522 = vld [vmem:[%s4 + $0xc] sm:$0xf]
    %v1523 = vld [vmem:[%s4 + $0x10] sm:$0xf]
    %v1524 = vld [vmem:[%s4 + $0x14] sm:$0xf]
    %v1525 = vld [vmem:[%s4 + $0x18] sm:$0xf]
    %v1526 = vld [vmem:[%s4 + $0x1c] sm:$0xf]
    %v1527 = vld [vmem:[%s4 + $0x20] sm:$0xf]
    %v1528 = vld [vmem:[%s4 + $0x24] sm:$0xf]
    %v1529 = vld [vmem:[%s4 + $0x28] sm:$0xf]
    %v1530 = vld [vmem:[%s4 + $0x2c] sm:$0xf]
    %v1531 = vld [vmem:[%s4 + $0x30] sm:$0xf]
    %v1532 = vld [vmem:[%s4 + $0x34] sm:$0xf]
    %v1533 = vld [vmem:[%s4 + $0x38] sm:$0xf]
    %v1534 = vld [vmem:[%s4 + $0x3c] sm:$0xf]
    %v1535 = vld [vmem:[%s5] sm:$0x1]
    %v1537 = vlaneseq
    %v1538 = vshrl.u32 %v1537, 7
    %v1539 = vsub.s32 0, %v1538
    %v1540 = vrot.slane %v1535, %v1539
    %v1558 = vunpack.c.l.b16 %v1519
    %v1559 = vunpack.c.l.b16 %v1520
    %v1560 = vunpack.c.l.b16 %v1521
    %v1561 = vunpack.c.l.b16 %v1522
    %v1562 = vunpack.c.l.b16 %v1523
    %v1563 = vunpack.c.l.b16 %v1524
    %v1564 = vunpack.c.l.b16 %v1525
    %v1565 = vunpack.c.l.b16 %v1526
    %v1566 = vunpack.c.l.b16 %v1527
    %v1567 = vunpack.c.l.b16 %v1528
    %v1568 = vunpack.c.l.b16 %v1529
    %v1569 = vunpack.c.l.b16 %v1530
    %v1570 = vunpack.c.l.b16 %v1531
    %v1571 = vunpack.c.l.b16 %v1532
    %v1572 = vunpack.c.l.b16 %v1533
    %v1573 = vunpack.c.l.b16 %v1534
    %v1574 = vpack.c.b16 %v1559, %v1558
    %v1575 = vpack.c.b16 %v1561, %v1560
    %v1576 = vpack.c.b16 %v1563, %v1562
    %v1577 = vpack.c.b16 %v1565, %v1564
    %v1578 = vpack.c.b16 %v1567, %v1566
    %v1579 = vpack.c.b16 %v1569, %v1568
    %v1580 = vpack.c.b16 %v1571, %v1570
    %v1581 = vpack.c.b16 %v1573, %v1572
    %1590 = vmatprep.subr.bf16.mxu0 0
    %1591 = vmatpush1.bf16.msra.mxu0 %v1574
    %1592 = vmatprep.subr.bf16.mxu0 0
    %1593 = vmatpush1.bf16.msra.mxu0 %v1575
    %1594 = vmatprep.subr.bf16.mxu0 0
    %1595 = vmatpush1.bf16.msra.mxu0 %v1576
    %1596 = vmatprep.subr.bf16.mxu0 0
    %1597 = vmatpush1.bf16.msra.mxu0 %v1577
    %1598 = vmatprep.subr.bf16.mxu0 0
    %1599 = vmatpush1.bf16.msra.mxu0 %v1578
    %1600 = vmatprep.subr.bf16.mxu0 0
    %1601 = vmatpush1.bf16.msra.mxu0 %v1579
    %1602 = vmatprep.subr.bf16.mxu0 0
    %1603 = vmatpush1.bf16.msra.mxu0 %v1580
    %1604 = vmatprep.subr.bf16.mxu0 0
    %1605 = vmatpush1.bf16.msra.mxu0 %v1581
    %1606 = vmatprep.subr.bf16.mxu0 0
    %1607 = vmatpush1.bf16.msra.mxu0 0
    %1608 = vmatprep.subr.bf16.mxu0 0
    %1609 = vmatpush1.bf16.msra.mxu0 0
    %1610 = vmatprep.subr.bf16.mxu0 0
    %1611 = vmatpush1.bf16.msra.mxu0 0
    %1612 = vmatprep.subr.bf16.mxu0 0
    %1613 = vmatpush1.bf16.msra.mxu0 0
    %1614 = vmatprep.subr.bf16.mxu0 0
    %1615 = vmatpush1.bf16.msra.mxu0 0
    %1616 = vmatprep.subr.bf16.mxu0 0
    %1617 = vmatpush1.bf16.msra.mxu0 0
    %1618 = vmatprep.subr.bf16.mxu0 0
    %1619 = vmatpush1.bf16.msra.mxu0 0
    %1620 = vmatprep.subr.bf16.mxu0 0
    %1621 = vmatpush1.bf16.msra.mxu0 0
    %1622 = vmatprep.mubr.bf16.mxu0 0
    %1623 = vmatmul.mubr.bf16.gmra.mrb[0].mxu0 %v1518
    %v1624 = vpop.f32.mrb[0].mxu0
    %v1625 = vadd.f32 %v1540, %v1624
    %v1626 = vpop.f32.mrb[0].mxu0
    %v1627 = vpop.f32.mrb[0].mxu0
    %v1628 = vpop.f32.mrb[0].mxu0
    %1629 = vdwg.mxu0
    %1630 = vmax.xlane.f32.xlu0 %v1625
    %v1631 = vpop.xlane.xlu0 %1630
    %v1632 = vsub.f32 %v1625, %v1631
    %v1633 = vmul.f32 %v1632, 1.442695
    %v1634 = vpow.pop %v1633
    %1635 = vadd.xlane.f32.xlu0 %v1634
    %v1636 = vpop.xlane.xlu0 %1635
    %v1637 = vrcp.pop %v1636
    %v1638 = vmul.f32 %v1634, %v1637
    %1639 = vst [vmem:[#allocation2] sm:$0xff] %v1638
    // Predicated region
    $region26: #{pytorch_model_forward.1} parent=1 // pred_check
      _
    $region27: #{pytorch_model_forward.1} parent=1 // pred_check_branch
      %1641 = sbr.rel (0) target = $region29
    $region28: #{pytorch_model_forward.1} parent=1 // pred_region
      %s1643 = ssub.s32 128, 128
      %1644 = vsyncadd [#allocation3], %s1643
      %s1646 = sshll.u32 [#allocation2], 4
      %s1647 = int_to_ptr.vmem [resolvable:$true] %s1646
      %1649 = dma.vmem_to_hbm [thread:$0]  %s1647, 128, %s6, [#allocation3]
    $region29: #{pytorch_model_forward.1} parent=1 // pred_fallthru
      _
    // Predicated region
    $region30: #{pytorch_model_forward.1} parent=1 // pred_check
      _
    $region31: #{pytorch_model_forward.1} parent=1 // pred_check_branch
      %1651 = sbr.rel (0) target = $region33
    $region32: #{pytorch_model_forward.1} parent=1 // pred_region
      %1652 = dma.done [#allocation3], 128
    $region33: #{pytorch_model_forward.1} parent=1 // pred_fallthru
      _
    %1653 = vsyncpa [#allocation3], 1

</llo_original>
